<compile_context>
chip_gen: v6e
topology: v6e:2x2x1
jax: 0.10.0
libtpu: 0.0.40
codegen_flags: <defaults>
</compile_context>

<pallas_src>
import functools

import jax
import jax.numpy as jnp
import numpy as np
from jax import lax
from jax.experimental import pallas as pl
from jax.experimental.pallas import tpu as pltpu


def _decoder_layer_kernel(x_ref, w_ref, g_ref, b_ref, o_ref, xpad_ref, *,
                          eps, slope):
    # x_ref   : (NB, H, W, Cin)      bf16 unpadded NHWC input block
    # w_ref   : (9*Cin, 4*Cout)      bf16 merged-parity im2col weights
    # g_ref   : (1, Cout)            f32 InstanceNorm gamma
    # b_ref   : (1, Cout)            f32 InstanceNorm beta
    # o_ref   : (NB, H, W, 4*Cout)   f32 output, columns ordered (py, px, c)
    # xpad_ref: (NB, H+2, W+2, Cin)  bf16 VMEM scratch (fused zero padding)
    NB, H, W, Cin = x_ref.shape
    four_c = o_ref.shape[-1]
    C = four_c // 4
    HW = H * W

    # ---- fused zero padding (no padded-activation HBM pass in the wrapper).
    # Re-zeroed every step so it is safe under megacore "parallel" sharding.
    xpad_ref[...] = jnp.zeros_like(xpad_ref)
    xpad_ref[:, 1:H + 1, 1:W + 1, :] = x_ref[...]

    # ---- shared 9-tap im2col patch (covers both row/col parities; the
    # row-shifted slices are shared between parities -> 9 slices, 1 concat).
    taps = []
    for a in range(3):
        for b in range(3):
            t = xpad_ref[:, a:a + H, b:b + W, :]           # (NB, H, W, Cin)
            taps.append(t.reshape(NB * HW, Cin))
    patch = jnp.concatenate(taps, axis=-1)                  # (NB*HW, 9*Cin) bf16

    # ---- single wide MXU matmul: bf16 x bf16 -> f32, 4*Cout output lanes.
    y = jnp.dot(patch, w_ref[...], preferred_element_type=jnp.float32)
    y3 = y.reshape(NB, HW, four_c)                          # (NB, HW, 4*Cout)

    # ---- per-sample InstanceNorm over all 4*H*W output pixels -------------
    inv_n = 1.0 / (4.0 * HW)

    def fold(s):  # sum the four (py, px) phase groups -> (NB, Cout)
        return s[:, 0:C] + s[:, C:2 * C] + s[:, 2 * C:3 * C] + s[:, 3 * C:4 * C]

    mean_c = fold(jnp.sum(y3, axis=1)) * inv_n              # (NB, Cout)
    mean4 = jnp.concatenate([mean_c] * 4, axis=-1)          # (NB, 4*Cout)
    yc = y3 - mean4[:, None, :]
    # Two-pass (centered) variance: no E[x^2]-E[x]^2 cancellation.
    var_c = fold(jnp.sum(yc * yc, axis=1)) * inv_n          # (NB, Cout)
    inv_std = lax.rsqrt(var_c + eps)

    scale_c = g_ref[...] * inv_std                          # (NB, Cout)
    scale4 = jnp.concatenate([scale_c] * 4, axis=-1)        # (NB, 4*Cout)
    beta4 = jnp.concatenate([b_ref[...]] * 4, axis=-1)      # (1, 4*Cout)

    z = yc * scale4[:, None, :] + beta4[:, None, :]
    z = jnp.maximum(z, slope * z)                           # LeakyReLU(0.2)
    o_ref[...] = z.reshape(NB, H, W, four_c).astype(o_ref.dtype)


def _merged_weight(weight):
    """(Cin, Cout, 4, 4) ConvTranspose2d weight -> (9*Cin, 4*Cout) im2col matrix.

    Row index    = (a*3 + b)*Cin + ci   for padded-input taps xp[t+a, s+b]
    Column index = (py*2 + px)*Cout + co  (output phase (py, px), channel co)
    Nonzero iff (a - py) in {0,1} and (b - px) in {0,1}, with kernel taps
    ky = 3 + py - 2a, kx = 3 + px - 2b (derived from oy = 2*iy + ky - 1).
    """
    Cin, Cout = weight.shape[0], weight.shape[1]
    w = weight.astype(jnp.float32)
    zero = jnp.zeros((Cin, Cout), jnp.float32)
    blocks = []
    for a in range(3):
        for b in range(3):
            cols = []
            for py in range(2):
                for px in range(2):
                    if (a - py) in (0, 1) and (b - px) in (0, 1):
                        ky = 3 + py - 2 * a
                        kx = 3 + px - 2 * b
                        cols.append(w[:, :, ky, kx])
                    else:
                        cols.append(zero)
            blocks.append(jnp.concatenate(cols, axis=1))    # (Cin, 4*Cout)
    return jnp.concatenate(blocks, axis=0)                  # (9*Cin, 4*Cout)


def _pick_block_n(n, hw, target_m=512, min_grid=2):
    """Largest divisor NB of n with NB*hw <= target_m, while keeping at least
    `min_grid` grid steps when possible (both v7x TensorCores busy)."""
    best = 1
    for cand in range(1, n + 1):
        if n % cand != 0:
            continue
        if cand * hw > target_m:
            break
        if n // cand >= min_grid or n < min_grid:
            best = cand
    return best


def decoder_layer_forward(x_nchw, weight, gamma, beta, *,
                          eps=1e-5, negative_slope=0.2):
    """ConvTranspose2d(k=4,s=2,p=1,bias=False) + InstanceNorm2d(affine) + LeakyReLU(0.2).

    x_nchw: (N, Cin, H, W) f32
    weight: (Cin, Cout, 4, 4)  (PyTorch ConvTranspose2d layout)
    gamma, beta: (Cout,) InstanceNorm affine params
    returns: (N, Cout, 2H, 2W) f32
    """
    N, Cin, H, W = x_nchw.shape
    Cin_w, Cout, KH, KW = weight.shape
    assert Cin == Cin_w and KH == 4 and KW == 4

    # NCHW -> NHWC + bf16 cast (one fused XLA pass; zero-padding is fused into
    # the kernel, so no extra padded-activation HBM round trip).
    x = jnp.transpose(x_nchw, (0, 2, 3, 1)).astype(jnp.bfloat16)

    wmat = _merged_weight(weight).astype(jnp.bfloat16)       # (9*Cin, 4*Cout)
    g = gamma.reshape(1, Cout).astype(jnp.float32)
    b = beta.reshape(1, Cout).astype(jnp.float32)

    NB = _pick_block_n(N, H * W)
    grid = (N // NB,)

    kernel = functools.partial(_decoder_layer_kernel, eps=float(eps),
                               slope=float(negative_slope))

    flops = 2 * N * (H * W) * (9 * Cin) * (4 * Cout)
    bytes_accessed = (2 * x.size + 2 * wmat.size + 4 * (g.size + b.size)
                      + 4 * N * H * W * 4 * Cout)

    out = pl.pallas_call(
        kernel,
        out_shape=jax.ShapeDtypeStruct((N, H, W, 4 * Cout), jnp.float32),
        grid_spec=pltpu.PrefetchScalarGridSpec(
            num_scalar_prefetch=0,
            grid=grid,
            in_specs=[
                pl.BlockSpec((NB, H, W, Cin), lambda n: (n, 0, 0, 0)),
                pl.BlockSpec((9 * Cin, 4 * Cout), lambda n: (0, 0)),
                pl.BlockSpec((1, Cout), lambda n: (0, 0)),
                pl.BlockSpec((1, Cout), lambda n: (0, 0)),
            ],
            out_specs=pl.BlockSpec((NB, H, W, 4 * Cout),
                                   lambda n: (n, 0, 0, 0)),
            scratch_shapes=[pltpu.VMEM((NB, H + 2, W + 2, Cin), jnp.bfloat16)],
        ),
        compiler_params=pltpu.CompilerParams(
            dimension_semantics=("parallel",),
            vmem_limit_bytes=64 * 1024 * 1024),
        cost_estimate=pl.CostEstimate(
            flops=flops,
            transcendentals=N * Cout,
            bytes_accessed=bytes_accessed),
    )(x, wmat, g, b)

    # (N, H, W, 4*Cout) with columns (py, px, c)  ->  (N, Cout, 2H, 2W).
    # Only one (interface-imposed) transpose remains in the wrapper.
    out = out.reshape(N, H, W, 2, 2, Cout)          # (n, t, s, py, px, c)
    out = jnp.transpose(out, (0, 5, 1, 3, 2, 4))    # (n, c, t, py, s, px)
    return out.reshape(N, Cout, 2 * H, 2 * W)


def reference_forward(x_nchw, weight, gamma, beta, eps=1e-5, slope=0.2):
    """Pure-JAX f32 reference: conv_transpose + InstanceNorm(affine) + LeakyReLU."""
    w_oihw = jnp.transpose(weight, (1, 0, 2, 3))[:, :, ::-1, ::-1]
    y = lax.conv_general_dilated(
        x_nchw, w_oihw,
        window_strides=(1, 1),
        padding=[(2, 2), (2, 2)],            # k - 1 - p = 2
        lhs_dilation=(2, 2),
        dimension_numbers=('NCHW', 'OIHW', 'NCHW'))
    mean = y.mean(axis=(2, 3), keepdims=True)
    var = y.var(axis=(2, 3), keepdims=True)  # biased, like PyTorch InstanceNorm
    yn = (y - mean) * lax.rsqrt(var + eps)
    yn = yn * gamma.reshape(1, -1, 1, 1) + beta.reshape(1, -1, 1, 1)
    return jnp.where(yn >= 0, yn, slope * yn)


if __name__ == "__main__":
    key = jax.random.PRNGKey(0)
    kx, kw, kg, kb = jax.random.split(key, 4)

    # DecoderLayer(scale=0) defaults: in_channels = 64*min(2**1,16) = 128,
    # out_channels = 64*min(2**0,16) = 64.
    scale = 0
    N, H, W = 2, 8, 8
    Cin = 64 * min(2 ** (scale + 1), 16)
    Cout = 64 * min(2 ** scale, 16)

    x = jax.random.normal(kx, (N, Cin, H, W), dtype=jnp.float32)
    weight = jax.random.normal(kw, (Cin, Cout, 4, 4), dtype=jnp.float32) * 0.05
    gamma = 1.0 + 0.1 * jax.random.normal(kg, (Cout,), dtype=jnp.float32)
    beta = 0.1 * jax.random.normal(kb, (Cout,), dtype=jnp.float32)

    y = jax.block_until_ready(decoder_layer_forward(x, weight, gamma, beta))
    assert y.shape == (N, Cout, 2 * H, 2 * W), y.shape

    y_ref = jax.block_until_ready(reference_forward(x, weight, gamma, beta))
    # bf16 MXU inputs with f32 accumulation -> loosened tolerance vs f32 ref.
    np.testing.assert_allclose(np.asarray(y), np.asarray(y_ref),
                               rtol=5e-2, atol=5e-2)

    print("KERNEL_OK")
</pallas_src>

<mosaic_0001>
module attributes {stable_mosaic.version = 11 : i64} {
  func.func @_decoder_layer_kernel(%arg0: i32, %arg1: memref<1x8x8x128xbf16, #tpu.memory_space<vmem>>, %arg2: memref<1152x256xbf16, #tpu.memory_space<vmem>>, %arg3: memref<1x64xf32, #tpu.memory_space<vmem>>, %arg4: memref<1x64xf32, #tpu.memory_space<vmem>>, %arg5: memref<1x8x8x256xf32, #tpu.memory_space<vmem>>, %arg6: memref<1x10x10x128xbf16, #tpu.memory_space<vmem>>) attributes {dimension_semantics = [#tpu.dimension_semantics<parallel>], iteration_bounds = array<i64: 2>, scalar_prefetch = 0 : i64, scratch_operands = 1 : i64, tpu.core_type = #tpu.core_type<tc>, window_params = [{transform_indices = @transform_0, window_bounds = array<i64: 1, 8, 8, 128>}, {pipeline_mode = #tpu.pipeline_mode<synchronous>, transform_indices = @transform_1, window_bounds = array<i64: 1152, 256>}, {pipeline_mode = #tpu.pipeline_mode<synchronous>, transform_indices = @transform_2, window_bounds = array<i64: 1, 64>}, {pipeline_mode = #tpu.pipeline_mode<synchronous>, transform_indices = @transform_3, window_bounds = array<i64: 1, 64>}, {transform_indices = @transform_4, window_bounds = array<i64: 1, 8, 8, 256>}]} {
    %cst = arith.constant 0.000000e+00 : bf16
    %0 = vector.broadcast %cst : bf16 to vector<1x10x10x128xbf16>
    %c0 = arith.constant 0 : index
    %c0_0 = arith.constant 0 : index
    %c0_1 = arith.constant 0 : index
    %c0_2 = arith.constant 0 : index
    %1 = vector.load %arg6[%c0, %c0_0, %c0_1, %c0_2] : memref<1x10x10x128xbf16, #tpu.memory_space<vmem>>, vector<1x10x10x128xbf16>
    tpu.vector_store %arg6[%c0, %c0_0, %c0_1, %c0_2], %0 {strides = array<i32>} : memref<1x10x10x128xbf16, #tpu.memory_space<vmem>>, vector<1x10x10x128xbf16>,
    %c0_3 = arith.constant 0 : index
    %c0_4 = arith.constant 0 : index
    %c0_5 = arith.constant 0 : index
    %c0_6 = arith.constant 0 : index
    %2 = vector.load %arg1[%c0_3, %c0_4, %c0_5, %c0_6] : memref<1x8x8x128xbf16, #tpu.memory_space<vmem>>, vector<1x8x8x128xbf16>
    %c0_7 = arith.constant 0 : index
    %c1 = arith.constant 1 : index
    %c1_8 = arith.constant 1 : index
    %c0_9 = arith.constant 0 : index
    %3 = vector.load %arg6[%c0_7, %c1, %c1_8, %c0_9] : memref<1x10x10x128xbf16, #tpu.memory_space<vmem>>, vector<1x8x8x128xbf16>
    tpu.vector_store %arg6[%c0_7, %c1, %c1_8, %c0_9], %2 {strides = array<i32>} : memref<1x10x10x128xbf16, #tpu.memory_space<vmem>>, vector<1x8x8x128xbf16>,
    %c0_10 = arith.constant 0 : index
    %c0_11 = arith.constant 0 : index
    %c0_12 = arith.constant 0 : index
    %c0_13 = arith.constant 0 : index
    %4 = vector.load %arg6[%c0_10, %c0_11, %c0_12, %c0_13] : memref<1x10x10x128xbf16, #tpu.memory_space<vmem>>, vector<1x8x8x128xbf16>
    %5 = vector.shape_cast %4 : vector<1x8x8x128xbf16> to vector<64x128xbf16>
    %c0_14 = arith.constant 0 : index
    %c0_15 = arith.constant 0 : index
    %c1_16 = arith.constant 1 : index
    %c0_17 = arith.constant 0 : index
    %6 = vector.load %arg6[%c0_14, %c0_15, %c1_16, %c0_17] : memref<1x10x10x128xbf16, #tpu.memory_space<vmem>>, vector<1x8x8x128xbf16>
    %7 = vector.shape_cast %6 : vector<1x8x8x128xbf16> to vector<64x128xbf16>
    %c0_18 = arith.constant 0 : index
    %c0_19 = arith.constant 0 : index
    %c2 = arith.constant 2 : index
    %c0_20 = arith.constant 0 : index
    %8 = vector.load %arg6[%c0_18, %c0_19, %c2, %c0_20] : memref<1x10x10x128xbf16, #tpu.memory_space<vmem>>, vector<1x8x8x128xbf16>
    %9 = vector.shape_cast %8 : vector<1x8x8x128xbf16> to vector<64x128xbf16>
    %c0_21 = arith.constant 0 : index
    %c1_22 = arith.constant 1 : index
    %c0_23 = arith.constant 0 : index
    %c0_24 = arith.constant 0 : index
    %10 = vector.load %arg6[%c0_21, %c1_22, %c0_23, %c0_24] : memref<1x10x10x128xbf16, #tpu.memory_space<vmem>>, vector<1x8x8x128xbf16>
    %11 = vector.shape_cast %10 : vector<1x8x8x128xbf16> to vector<64x128xbf16>
    %c0_25 = arith.constant 0 : index
    %c1_26 = arith.constant 1 : index
    %c1_27 = arith.constant 1 : index
    %c0_28 = arith.constant 0 : index
    %12 = vector.load %arg6[%c0_25, %c1_26, %c1_27, %c0_28] : memref<1x10x10x128xbf16, #tpu.memory_space<vmem>>, vector<1x8x8x128xbf16>
    %13 = vector.shape_cast %12 : vector<1x8x8x128xbf16> to vector<64x128xbf16>
    %c0_29 = arith.constant 0 : index
    %c1_30 = arith.constant 1 : index
    %c2_31 = arith.constant 2 : index
    %c0_32 = arith.constant 0 : index
    %14 = vector.load %arg6[%c0_29, %c1_30, %c2_31, %c0_32] : memref<1x10x10x128xbf16, #tpu.memory_space<vmem>>, vector<1x8x8x128xbf16>
    %15 = vector.shape_cast %14 : vector<1x8x8x128xbf16> to vector<64x128xbf16>
    %c0_33 = arith.constant 0 : index
    %c2_34 = arith.constant 2 : index
    %c0_35 = arith.constant 0 : index
    %c0_36 = arith.constant 0 : index
    %16 = vector.load %arg6[%c0_33, %c2_34, %c0_35, %c0_36] : memref<1x10x10x128xbf16, #tpu.memory_space<vmem>>, vector<1x8x8x128xbf16>
    %17 = vector.shape_cast %16 : vector<1x8x8x128xbf16> to vector<64x128xbf16>
    %c0_37 = arith.constant 0 : index
    %c2_38 = arith.constant 2 : index
    %c1_39 = arith.constant 1 : index
    %c0_40 = arith.constant 0 : index
    %18 = vector.load %arg6[%c0_37, %c2_38, %c1_39, %c0_40] : memref<1x10x10x128xbf16, #tpu.memory_space<vmem>>, vector<1x8x8x128xbf16>
    %19 = vector.shape_cast %18 : vector<1x8x8x128xbf16> to vector<64x128xbf16>
    %c0_41 = arith.constant 0 : index
    %c2_42 = arith.constant 2 : index
    %c2_43 = arith.constant 2 : index
    %c0_44 = arith.constant 0 : index
    %20 = vector.load %arg6[%c0_41, %c2_42, %c2_43, %c0_44] : memref<1x10x10x128xbf16, #tpu.memory_space<vmem>>, vector<1x8x8x128xbf16>
    %21 = vector.shape_cast %20 : vector<1x8x8x128xbf16> to vector<64x128xbf16>
    %22 = tpu.concatenate %5, %7, %9, %11, %13, %15, %17, %19, %21 in 1 : vector<64x128xbf16>, vector<64x128xbf16>, vector<64x128xbf16>, vector<64x128xbf16>, vector<64x128xbf16>, vector<64x128xbf16>, vector<64x128xbf16>, vector<64x128xbf16>, vector<64x128xbf16> -> vector<64x1152xbf16>
    %c0_45 = arith.constant 0 : index
    %c0_46 = arith.constant 0 : index
    %23 = vector.load %arg2[%c0_45, %c0_46] : memref<1152x256xbf16, #tpu.memory_space<vmem>>, vector<1152x256xbf16>
    %cst_47 = arith.constant dense<0.000000e+00> : vector<64x256xf32>
    %24 = tpu.matmul %22, %23, %cst_47 {dimension_numbers = #tpu.dot_dimension_numbers<[1], [0], [0], [1], [0, 0, 1, 1], [], []>} : vector<64x1152xbf16>, vector<1152x256xbf16>, vector<64x256xf32> -> vector<64x256xf32>
    %25 = vector.shape_cast %24 : vector<64x256xf32> to vector<1x64x256xf32>
    %cst_48 = arith.constant dense<0.000000e+00> : vector<1x256xf32>
    %26 = vector.multi_reduction <add>, %25, %cst_48 [1] : vector<1x64x256xf32> to vector<1x256xf32>
    %27 = vector.extract_strided_slice %26 {offsets = [0, 0], sizes = [1, 64], strides = [1, 1]} : vector<1x256xf32> to vector<1x64xf32>
    %28 = vector.extract_strided_slice %26 {offsets = [0, 64], sizes = [1, 64], strides = [1, 1]} : vector<1x256xf32> to vector<1x64xf32>
    %29 = arith.addf %27, %28 : vector<1x64xf32>
    %30 = vector.extract_strided_slice %26 {offsets = [0, 128], sizes = [1, 64], strides = [1, 1]} : vector<1x256xf32> to vector<1x64xf32>
    %31 = arith.addf %29, %30 : vector<1x64xf32>
    %32 = vector.extract_strided_slice %26 {offsets = [0, 192], sizes = [1, 64], strides = [1, 1]} : vector<1x256xf32> to vector<1x64xf32>
    %33 = arith.addf %31, %32 : vector<1x64xf32>
    %cst_49 = arith.constant 3.906250e-03 : f32
    %34 = vector.broadcast %cst_49 : f32 to vector<1x64xf32>
    %35 = arith.mulf %33, %34 : vector<1x64xf32>
    %36 = tpu.concatenate %35, %35, %35, %35 in 1 : vector<1x64xf32>, vector<1x64xf32>, vector<1x64xf32>, vector<1x64xf32> -> vector<1x256xf32>
    %37 = vector.shape_cast %36 : vector<1x256xf32> to vector<1x1x256xf32>
    %38 = vector.broadcast %37 : vector<1x1x256xf32> to vector<1x64x256xf32>
    %39 = arith.subf %25, %38 : vector<1x64x256xf32>
    %40 = arith.mulf %39, %39 : vector<1x64x256xf32>
    %cst_50 = arith.constant dense<0.000000e+00> : vector<1x256xf32>
    %41 = vector.multi_reduction <add>, %40, %cst_50 [1] : vector<1x64x256xf32> to vector<1x256xf32>
    %42 = vector.extract_strided_slice %41 {offsets = [0, 0], sizes = [1, 64], strides = [1, 1]} : vector<1x256xf32> to vector<1x64xf32>
    %43 = vector.extract_strided_slice %41 {offsets = [0, 64], sizes = [1, 64], strides = [1, 1]} : vector<1x256xf32> to vector<1x64xf32>
    %44 = arith.addf %42, %43 : vector<1x64xf32>
    %45 = vector.extract_strided_slice %41 {offsets = [0, 128], sizes = [1, 64], strides = [1, 1]} : vector<1x256xf32> to vector<1x64xf32>
    %46 = arith.addf %44, %45 : vector<1x64xf32>
    %47 = vector.extract_strided_slice %41 {offsets = [0, 192], sizes = [1, 64], strides = [1, 1]} : vector<1x256xf32> to vector<1x64xf32>
    %48 = arith.addf %46, %47 : vector<1x64xf32>
    %cst_51 = arith.constant 3.906250e-03 : f32
    %49 = vector.broadcast %cst_51 : f32 to vector<1x64xf32>
    %50 = arith.mulf %48, %49 : vector<1x64xf32>
    %cst_52 = arith.constant 9.99999974E-6 : f32
    %51 = vector.broadcast %cst_52 : f32 to vector<1x64xf32>
    %52 = arith.addf %50, %51 : vector<1x64xf32>
    %53 = math.rsqrt %52 : vector<1x64xf32>
    %c0_53 = arith.constant 0 : index
    %c0_54 = arith.constant 0 : index
    %54 = vector.load %arg3[%c0_53, %c0_54] : memref<1x64xf32, #tpu.memory_space<vmem>>, vector<1x64xf32>
    %55 = arith.mulf %54, %53 : vector<1x64xf32>
    %56 = tpu.concatenate %55, %55, %55, %55 in 1 : vector<1x64xf32>, vector<1x64xf32>, vector<1x64xf32>, vector<1x64xf32> -> vector<1x256xf32>
    %c0_55 = arith.constant 0 : index
    %c0_56 = arith.constant 0 : index
    %57 = vector.load %arg4[%c0_55, %c0_56] : memref<1x64xf32, #tpu.memory_space<vmem>>, vector<1x64xf32>
    %58 = tpu.concatenate %57, %57, %57, %57 in 1 : vector<1x64xf32>, vector<1x64xf32>, vector<1x64xf32>, vector<1x64xf32> -> vector<1x256xf32>
    %59 = vector.shape_cast %56 : vector<1x256xf32> to vector<1x1x256xf32>
    %60 = vector.broadcast %59 : vector<1x1x256xf32> to vector<1x64x256xf32>
    %61 = arith.mulf %39, %60 : vector<1x64x256xf32>
    %62 = vector.shape_cast %58 : vector<1x256xf32> to vector<1x1x256xf32>
    %63 = vector.broadcast %62 : vector<1x1x256xf32> to vector<1x64x256xf32>
    %64 = arith.addf %61, %63 : vector<1x64x256xf32>
    %cst_57 = arith.constant 2.000000e-01 : f32
    %65 = vector.broadcast %cst_57 : f32 to vector<1x64x256xf32>
    %66 = arith.mulf %65, %64 : vector<1x64x256xf32>
    %67 = arith.maximumf %64, %66 : vector<1x64x256xf32>
    %68 = vector.shape_cast %67 : vector<1x64x256xf32> to vector<1x8x8x256xf32>
    %c0_58 = arith.constant 0 : index
    %c0_59 = arith.constant 0 : index
    %c0_60 = arith.constant 0 : index
    %c0_61 = arith.constant 0 : index
    %69 = vector.load %arg5[%c0_58, %c0_59, %c0_60, %c0_61] : memref<1x8x8x256xf32, #tpu.memory_space<vmem>>, vector<1x8x8x256xf32>
    tpu.vector_store %arg5[%c0_58, %c0_59, %c0_60, %c0_61], %68 {strides = array<i32>} : memref<1x8x8x256xf32, #tpu.memory_space<vmem>>, vector<1x8x8x256xf32>,
    return
  }
  func.func @transform_0(%arg0: i32) -> (i32, i32, i32, i32) {
    %c0_i32 = arith.constant 0 : i32
    %c0_i32_0 = arith.constant 0 : i32
    %c0_i32_1 = arith.constant 0 : i32
    %c0_i32_2 = arith.constant 0 : i32
    return %arg0, %c0_i32, %c0_i32_0, %c0_i32_1 : i32, i32, i32, i32
  }
  func.func @transform_1(%arg0: i32) -> (i32, i32) {
    %c0_i32 = arith.constant 0 : i32
    %c0_i32_0 = arith.constant 0 : i32
    %c0_i32_1 = arith.constant 0 : i32
    return %c0_i32, %c0_i32_0 : i32, i32
  }
  func.func @transform_2(%arg0: i32) -> (i32, i32) {
    %c0_i32 = arith.constant 0 : i32
    %c0_i32_0 = arith.constant 0 : i32
    %c0_i32_1 = arith.constant 0 : i32
    return %c0_i32, %c0_i32_0 : i32, i32
  }
  func.func @transform_3(%arg0: i32) -> (i32, i32) {
    %c0_i32 = arith.constant 0 : i32
    %c0_i32_0 = arith.constant 0 : i32
    %c0_i32_1 = arith.constant 0 : i32
    return %c0_i32, %c0_i32_0 : i32, i32
  }
  func.func @transform_4(%arg0: i32) -> (i32, i32, i32, i32) {
    %c0_i32 = arith.constant 0 : i32
    %c0_i32_0 = arith.constant 0 : i32
    %c0_i32_1 = arith.constant 0 : i32
    %c0_i32_2 = arith.constant 0 : i32
    return %arg0, %c0_i32, %c0_i32_0, %c0_i32_1 : i32, i32, i32, i32
  }
}

</mosaic_0001>

<llo_original>
// kernel: tpu_custom_call.1
$region0: #{tpu_custom_call.1}
  #allocation0 [shape = 'u32[]', space=smem, size = 0x4, offset = 0x4, fixed_abs, tag = 'smem constant byte address 0x4 - core index']
  #allocation1 [shape = 'u32[144,128]{1,0:T(1,128)}', space=vmem, size = 0x12000, scoped, tag = 'internal scratch']
  #allocation2 [shape = 'bf16[1,10,10,128]{3,2,1,0:T(8,128)(2,1)}', space=vmem, size = 0xa000, scoped, tag = 'scratch operand']
  %s0 = inlined_call_operand.hbm [shape: bf16[2,8,8,128], index: 0, kind: input, shape index: {}]
  %s1 = inlined_call_operand.hbm [shape: bf16[1152,256], index: 1, kind: input, shape index: {}]
  %s2 = inlined_call_operand.vmem [shape: f32[1,64], index: 2, kind: input, shape index: {}]
  %s3 = inlined_call_operand.vmem [shape: f32[1,64], index: 3, kind: input, shape index: {}]
  %s4 = inlined_call_operand.hbm [shape: f32[2,8,8,256], index: 4, kind: output, shape index: {}]
  %s5 = sld [smem:[#allocation0]]
  $region57: #{tpu_custom_call.1} parent=0
    _
  %s7 = ssub.s32 1, %s5
  %s8 = scalar_select 0, %s7, %s5
  $region1: #{tpu_custom_call.1} parent=0
    #allocation3 [shape = 'u8[32768]{0}', space=vmem, size = 0x8000, scoped, tag = 'input window, operand 0']
    #allocation4 [shape = 's32[2]{0}', space=sflag, size = 0x8, scoped, tag = 'scoped memory for tpu_custom_call.1']
    #allocation5 [shape = 's32[2]{0}', space=sflag, size = 0x8, scoped, tag = 'scoped memory for tpu_custom_call.1']
    #allocation6 [shape = 'u8[589824]{0}', space=vmem, size = 0x90000, scoped, tag = 'input window, operand 1, single buffered']
    #allocation7 [shape = 's32[1]{0}', space=sflag, size = 0x4, scoped, tag = 'scoped memory for tpu_custom_call.1']
    #allocation8 [shape = 'u8[131072]{0}', space=vmem, size = 0x20000, scoped, tag = 'output window, operand 0']
    %9 = vsyncpa [#allocation4], 0
    %s10 = scalar_lea.sflag [#allocation4], 1
    %11 = vsyncpa %s10, 0
    %12 = vsyncpa [#allocation7], 0
    %13 = vsyncpa [#allocation5], 0
    %s14 = scalar_lea.sflag [#allocation5], 1
    %15 = vsyncpa %s14, 0
    loop: start=0, step=1, limit=4
    $region2: #{tpu_custom_call.1} parent=1 // loop_pre_header
      _
    $region3: #{tpu_custom_call.1} parent=1 // loop_header
      %s17 = sphi 0, %s21
      %p18 = scmp.ge.s32.totalorder %s17, 4
      %s27 = sphi 0, %s29
      %s30 = sphi 0, %s27
      %s31 = sphi 0, %s30
      %s47 = sphi 0, %s31
      %s51 = sphi 0, %s51
      %s53 = sphi 0, %s51
      %s54 = sphi 0, %s53
      %s68 = sphi 0, %s54
      %s72 = sphi 0, %s72
      %s74 = sphi 0, %s72
      %s75 = sphi 0, %s74
      %s89 = sphi 0, %s75
      %s93 = sphi 0, %s93
      %s95 = sphi 0, %s93
      %s96 = sphi 0, %s95
      %s110 = sphi 0, %s96
      %s116 = sphi 0, %s118
      %s119 = sphi 0, %s116
      %s120 = sphi 0, %s119
      %s136 = sphi 0, %s120
    $region4: #{tpu_custom_call.1} parent=1 // loop_header_branch
      %20 = sbr.rel (%p18) target = $region8
    $region5: #{tpu_custom_call.1} parent=1 // loop_body
      %s22 = ssub.s32 %s17, 1
      %s23 = ssub.s32 %s17, 2
      %s24 = sadd.s32 %s17, 1
      %s25 = ssub.s32 %s17, %s24
      %p26 = scmp.eq.s32.totalorder %s25, 0
      %s28 = sadd.s32 %s27, 1
      %s29 = scalar_select %p26, %s27, %s28
      %p32 = pneg %p26
      %p33 = scmp.eq.s32.totalorder %s17, 1
      %p34 = por %p32, %p33
      %p35 = scmp.ne.s32.totalorder %s27, %s30
      %p36 = scmp.eq.s32.totalorder %s17, 0
      %p37 = por %p35, %p36
      %p38 = scmp.ne.s32.totalorder %s27, %s30
      %p39 = scmp.eq.s32.totalorder %s22, 1
      %p40 = por %p38, %p39
      %p41 = scmp.ne.s32.totalorder %s30, %s31
      %p42 = scmp.eq.s32.totalorder %s22, 0
      %p43 = por %p41, %p42
      %p44 = scmp.ne.s32.totalorder %s30, %s31
      %p45 = scmp.eq.s32.totalorder %s23, 1
      %p46 = por %p44, %p45
      %p48 = scmp.ne.s32.totalorder %s31, %s47
      %p49 = scmp.eq.s32.totalorder %s23, 0
      %p50 = por %p48, %p49
      %s52 = sadd.s32 %s51, 1
      %p55 = scmp.eq.s32.totalorder %s17, 1
      %p56 = scmp.ne.s32.totalorder %s51, %s53
      %p57 = scmp.eq.s32.totalorder %s17, 0
      %p58 = por %p56, %p57
      %p59 = scmp.ne.s32.totalorder %s51, %s53
      %p60 = scmp.eq.s32.totalorder %s22, 1
      %p61 = por %p59, %p60
      %p62 = scmp.ne.s32.totalorder %s53, %s54
      %p63 = scmp.eq.s32.totalorder %s22, 0
      %p64 = por %p62, %p63
      %p65 = scmp.ne.s32.totalorder %s53, %s54
      %p66 = scmp.eq.s32.totalorder %s23, 1
      %p67 = por %p65, %p66
      %p69 = scmp.ne.s32.totalorder %s54, %s68
      %p70 = scmp.eq.s32.totalorder %s23, 0
      %p71 = por %p69, %p70
      %s73 = sadd.s32 %s72, 1
      %p76 = scmp.eq.s32.totalorder %s17, 1
      %p77 = scmp.ne.s32.totalorder %s72, %s74
      %p78 = scmp.eq.s32.totalorder %s17, 0
      %p79 = por %p77, %p78
      %p80 = scmp.ne.s32.totalorder %s72, %s74
      %p81 = scmp.eq.s32.totalorder %s22, 1
      %p82 = por %p80, %p81
      %p83 = scmp.ne.s32.totalorder %s74, %s75
      %p84 = scmp.eq.s32.totalorder %s22, 0
      %p85 = por %p83, %p84
      %p86 = scmp.ne.s32.totalorder %s74, %s75
      %p87 = scmp.eq.s32.totalorder %s23, 1
      %p88 = por %p86, %p87
      %p90 = scmp.ne.s32.totalorder %s75, %s89
      %p91 = scmp.eq.s32.totalorder %s23, 0
      %p92 = por %p90, %p91
      %s94 = sadd.s32 %s93, 1
      %p97 = scmp.eq.s32.totalorder %s17, 1
      %p98 = scmp.ne.s32.totalorder %s93, %s95
      %p99 = scmp.eq.s32.totalorder %s17, 0
      %p100 = por %p98, %p99
      %p101 = scmp.ne.s32.totalorder %s93, %s95
      %p102 = scmp.eq.s32.totalorder %s22, 1
      %p103 = por %p101, %p102
      %p104 = scmp.ne.s32.totalorder %s95, %s96
      %p105 = scmp.eq.s32.totalorder %s22, 0
      %p106 = por %p104, %p105
      %p107 = scmp.ne.s32.totalorder %s95, %s96
      %p108 = scmp.eq.s32.totalorder %s23, 1
      %p109 = por %p107, %p108
      %p111 = scmp.ne.s32.totalorder %s96, %s110
      %p112 = scmp.eq.s32.totalorder %s23, 0
      %p113 = por %p111, %p112
      %s114 = ssub.s32 %s17, %s24
      %p115 = scmp.eq.s32.totalorder %s114, 0
      %s117 = sadd.s32 %s116, 1
      %s118 = scalar_select %p115, %s116, %s117
      %p121 = pneg %p115
      %p122 = scmp.eq.s32.totalorder %s17, 1
      %p123 = por %p121, %p122
      %p124 = scmp.ne.s32.totalorder %s116, %s119
      %p125 = scmp.eq.s32.totalorder %s17, 0
      %p126 = por %p124, %p125
      %p127 = scmp.ne.s32.totalorder %s116, %s119
      %p128 = scmp.eq.s32.totalorder %s22, 1
      %p129 = por %p127, %p128
      %p130 = scmp.ne.s32.totalorder %s119, %s120
      %p131 = scmp.eq.s32.totalorder %s22, 0
      %p132 = por %p130, %p131
      %p133 = scmp.ne.s32.totalorder %s119, %s120
      %p134 = scmp.eq.s32.totalorder %s23, 1
      %p135 = por %p133, %p134
      %p137 = scmp.ne.s32.totalorder %s120, %s136
      %p138 = scmp.eq.s32.totalorder %s23, 0
      %p139 = por %p137, %p138
      %p140 = scmp.le.s32.totalorder 1, %s17
      %p141 = scmp.lt.s32.totalorder %s17, 3
      %p142 = pnand %p140, %p141
      %p143 = pneg %p142
      // Predicated region
      $region9: #{tpu_custom_call.1} parent=5 // pred_check
        _
      $region10: #{tpu_custom_call.1} parent=5 // pred_check_branch
        %145 = sbr.rel (%p142) target = $region12
      $region11: #{tpu_custom_call.1} parent=5 // pred_region
        %s146 = ssub.s32 %s17, 1
        // Predicated region
        $region13: #{tpu_custom_call.1} parent=11 // pred_check
          %p147 = pneg %p64
        $region14: #{tpu_custom_call.1} parent=11 // pred_check_branch
          %149 = sbr.rel (%p147) target = $region16
        $region15: #{tpu_custom_call.1} parent=11 // pred_region
          %s151 = ssub.s32 18432, 18432
          %152 = vsyncadd [#allocation7], %s151
          %s153 = sshll.u32 [#allocation6], 4
          %s154 = int_to_ptr.vmem [resolvable:$true] %s153
          %159 = dma.hbm_to_vmem [thread:$0]  %s1, 18432, %s154, [#allocation7], 128, 128, 8
        $region16: #{tpu_custom_call.1} parent=11 // pred_fallthru
          _
        // Predicated region
        $region17: #{tpu_custom_call.1} parent=11 // pred_check
          %p160 = pneg %p85
        $region18: #{tpu_custom_call.1} parent=11 // pred_check_branch
          %162 = sbr.rel (%p160) target = $region20
        $region19: #{tpu_custom_call.1} parent=11 // pred_region
          _
        $region20: #{tpu_custom_call.1} parent=11 // pred_fallthru
          _
        // Predicated region
        $region21: #{tpu_custom_call.1} parent=11 // pred_check
          %p163 = pneg %p106
        $region22: #{tpu_custom_call.1} parent=11 // pred_check_branch
          %165 = sbr.rel (%p163) target = $region24
        $region23: #{tpu_custom_call.1} parent=11 // pred_region
          _
        $region24: #{tpu_custom_call.1} parent=11 // pred_fallthru
          _
      $region12: #{tpu_custom_call.1} parent=5 // pred_fallthru
        _
      %p166 = scmp.lt.s32.totalorder %s17, 2
      // Predicated region
      $region25: #{tpu_custom_call.1} parent=5 // pred_check
        %p167 = pneg %p166
      $region26: #{tpu_custom_call.1} parent=5 // pred_check_branch
        %169 = sbr.rel (%p167) target = $region28
      $region27: #{tpu_custom_call.1} parent=5 // pred_region
        // Predicated region
        $region29: #{tpu_custom_call.1} parent=27 // pred_check
          %p170 = pneg %p37
        $region30: #{tpu_custom_call.1} parent=27 // pred_check_branch
          %172 = sbr.rel (%p170) target = $region32
        $region31: #{tpu_custom_call.1} parent=27 // pred_region
          %s173 = sand.u32 %s27, 1
          %s174 = scalar_lea.sflag [#allocation4], %s173
          %s175 = sand.u32 %s27, 1
          %s176 = smul.addr %s175, 32
          %s177 = scalar_lea.vmem [#allocation3], %s176
          %s179 = ssub.s32 512, 512
          %180 = vsyncadd %s174, %s179
          %s181 = smul.addr %s17, 8
          %s182 = smul.addr %s181, 64
          %s183 = scalar_lea.hbm %s0, %s182
          %s184 = sshll.u32 %s177, 4
          %s185 = int_to_ptr.vmem [resolvable:$true] %s184
          %190 = dma.hbm_to_vmem [thread:$0]  %s183, 512, %s185, %s174, 64, 64, 4
        $region32: #{tpu_custom_call.1} parent=27 // pred_fallthru
          _
      $region28: #{tpu_custom_call.1} parent=5 // pred_fallthru
        _
      %p191 = scmp.le.s32.totalorder 1, %s17
      %p192 = scmp.lt.s32.totalorder %s17, 3
      %p193 = pnand %p191, %p192
      %p194 = pneg %p193
      // Predicated region
      $region33: #{tpu_custom_call.1} parent=5 // pred_check
        _
      $region34: #{tpu_custom_call.1} parent=5 // pred_check_branch
        %196 = sbr.rel (%p193) target = $region36
      $region35: #{tpu_custom_call.1} parent=5 // pred_region
        %s197 = ssub.s32 %s17, 1
        %s198 = sand.u32 %s30, 1
        %s199 = scalar_lea.sflag [#allocation4], %s198
        %s200 = sand.u32 %s30, 1
        %s201 = smul.addr %s200, 32
        %s202 = scalar_lea.vmem [#allocation3], %s201
        // Predicated region
        $region37: #{tpu_custom_call.1} parent=35 // pred_check
          %p203 = pneg %p43
        $region38: #{tpu_custom_call.1} parent=35 // pred_check_branch
          %205 = sbr.rel (%p203) target = $region40
        $region39: #{tpu_custom_call.1} parent=35 // pred_region
          %206 = dma.done %s199, 512
        $region40: #{tpu_custom_call.1} parent=35 // pred_fallthru
          _
        // Predicated region
        $region41: #{tpu_custom_call.1} parent=35 // pred_check
          %p207 = pneg %p64
        $region42: #{tpu_custom_call.1} parent=35 // pred_check_branch
          %209 = sbr.rel (%p207) target = $region44
        $region43: #{tpu_custom_call.1} parent=35 // pred_region
          %210 = dma.done [#allocation7], 18432
        $region44: #{tpu_custom_call.1} parent=35 // pred_fallthru
          _
        %s211 = sand.u32 %s30, 1
        %s212 = scalar_lea.sflag [#allocation4], %s211
        %s213 = sand.u32 %s30, 1
        %s214 = smul.addr %s213, 32
        %s215 = scalar_lea.vmem [#allocation3], %s214
        %p216 = pneg %p43
        %p217 = pneg %p40
        %p218 = pneg %p64
        %p219 = pneg %p61
        %p220 = pneg %p85
        %p221 = pneg %p82
        %p222 = pneg %p106
        %p223 = pneg %p103
        %p224 = pneg %p132
        %p225 = pneg %p129
        %s226 = sand.u32 %s119, 1
        %s227 = scalar_lea.sflag [#allocation5], %s226
        %s228 = sand.u32 %s119, 1
        %s229 = smul.addr %s228, 128
        %s230 = scalar_lea.vmem [#allocation8], %s229
        %232 = vst [vmem:[#allocation2] sm:$0xf] 0
        %233 = vst [vmem:[#allocation2 + $0x4] sm:$0x1] 0
        %234 = vst [vmem:[#allocation2 + $0x8] sm:$0xf] 0
        %235 = vst [vmem:[#allocation2 + $0xc] sm:$0x1] 0
        %236 = vst [vmem:[#allocation2 + $0x10] sm:$0xf] 0
        %237 = vst [vmem:[#allocation2 + $0x14] sm:$0x1] 0
        %238 = vst [vmem:[#allocation2 + $0x18] sm:$0xf] 0
        %239 = vst [vmem:[#allocation2 + $0x1c] sm:$0x1] 0
        %240 = vst [vmem:[#allocation2 + $0x20] sm:$0xf] 0
        %241 = vst [vmem:[#allocation2 + $0x24] sm:$0x1] 0
        %242 = vst [vmem:[#allocation2 + $0x28] sm:$0xf] 0
        %243 = vst [vmem:[#allocation2 + $0x2c] sm:$0x1] 0
        %244 = vst [vmem:[#allocation2 + $0x30] sm:$0xf] 0
        %245 = vst [vmem:[#allocation2 + $0x34] sm:$0x1] 0
        %246 = vst [vmem:[#allocation2 + $0x38] sm:$0xf] 0
        %247 = vst [vmem:[#allocation2 + $0x3c] sm:$0x1] 0
        %248 = vst [vmem:[#allocation2 + $0x40] sm:$0xf] 0
        %249 = vst [vmem:[#allocation2 + $0x44] sm:$0x1] 0
        %250 = vst [vmem:[#allocation2 + $0x48] sm:$0xf] 0
        %251 = vst [vmem:[#allocation2 + $0x4c] sm:$0x1] 0
        %v252 = vld [vmem:[%s202] sm:$0xf]
        %v253 = vld [vmem:[%s202 + $0x4] sm:$0xf]
        %v254 = vld [vmem:[%s202 + $0x8] sm:$0xf]
        %v255 = vld [vmem:[%s202 + $0xc] sm:$0xf]
        %v256 = vld [vmem:[%s202 + $0x10] sm:$0xf]
        %v257 = vld [vmem:[%s202 + $0x14] sm:$0xf]
        %v258 = vld [vmem:[%s202 + $0x18] sm:$0xf]
        %v259 = vld [vmem:[%s202 + $0x1c] sm:$0xf]
        %v261 = vshrl.u32 %v252, 16
        %v263 = vrot.slane %v261, 7
        %v264 = vshll.u32 %v252, 16
        %v266 = vor.u32 %v263, %v264
        %v267 = vrot.slane %v263, 4
        %v269 = vshrl.u32 %v253, 16
        %v271 = vrot.slane %v269, 7
        %v272 = vshll.u32 %v253, 16
        %v274 = vor.u32 %v271, %v272
        %v275 = vrot.slane %v271, 4
        %v277 = vshrl.u32 %v254, 16
        %v279 = vrot.slane %v277, 7
        %v280 = vshll.u32 %v254, 16
        %v282 = vor.u32 %v279, %v280
        %v283 = vrot.slane %v279, 4
        %v285 = vshrl.u32 %v255, 16
        %v287 = vrot.slane %v285, 7
        %v288 = vshll.u32 %v255, 16
        %v290 = vor.u32 %v287, %v288
        %v291 = vrot.slane %v287, 4
        %v293 = vshrl.u32 %v256, 16
        %v295 = vrot.slane %v293, 7
        %v296 = vshll.u32 %v256, 16
        %v298 = vor.u32 %v295, %v296
        %v299 = vrot.slane %v295, 4
        %v301 = vshrl.u32 %v257, 16
        %v303 = vrot.slane %v301, 7
        %v304 = vshll.u32 %v257, 16
        %v306 = vor.u32 %v303, %v304
        %v307 = vrot.slane %v303, 4
        %v309 = vshrl.u32 %v258, 16
        %v311 = vrot.slane %v309, 7
        %v312 = vshll.u32 %v258, 16
        %v314 = vor.u32 %v311, %v312
        %v315 = vrot.slane %v311, 4
        %v317 = vshrl.u32 %v259, 16
        %v319 = vrot.slane %v317, 7
        %v320 = vshll.u32 %v259, 16
        %v322 = vor.u32 %v319, %v320
        %v323 = vrot.slane %v319, 4
        %s340 = scalar_lea.vmem [#allocation2], 8
        %vm341 = vcmask 1043456
        %vm342 = vsmask.f32 7938
        %vm343 = vmand %vm341, %vm342
        %v344 = vld [vmem:[%s340] sm:$0xf]
        %v345 = vsel %vm343, %v266, %v344
        %346 = vst [vmem:[%s340] sm:$0xf] %v345
        %vm347 = vcmask 1040384
        %vm348 = vsmask.f32 256
        %vm349 = vmand %vm347, %vm348
        %v350 = vld [vmem:[%s340 + $0x4] sm:$0x1]
        %v351 = vsel %vm349, %v267, %v350
        %352 = vst [vmem:[%s340 + $0x4] sm:$0x1] %v351
        %v353 = vld [vmem:[%s340 + $0x8] sm:$0xf]
        %v354 = vsel %vm343, %v274, %v353
        %355 = vst [vmem:[%s340 + $0x8] sm:$0xf] %v354
        %v356 = vld [vmem:[%s340 + $0xc] sm:$0x1]
        %v357 = vsel %vm349, %v275, %v356
        %358 = vst [vmem:[%s340 + $0xc] sm:$0x1] %v357
        %v359 = vld [vmem:[%s340 + $0x10] sm:$0xf]
        %v360 = vsel %vm343, %v282, %v359
        %361 = vst [vmem:[%s340 + $0x10] sm:$0xf] %v360
        %v362 = vld [vmem:[%s340 + $0x14] sm:$0x1]
        %v363 = vsel %vm349, %v283, %v362
        %364 = vst [vmem:[%s340 + $0x14] sm:$0x1] %v363
        %v365 = vld [vmem:[%s340 + $0x18] sm:$0xf]
        %v366 = vsel %vm343, %v290, %v365
        %367 = vst [vmem:[%s340 + $0x18] sm:$0xf] %v366
        %v368 = vld [vmem:[%s340 + $0x1c] sm:$0x1]
        %v369 = vsel %vm349, %v291, %v368
        %370 = vst [vmem:[%s340 + $0x1c] sm:$0x1] %v369
        %v371 = vld [vmem:[%s340 + $0x20] sm:$0xf]
        %v372 = vsel %vm343, %v298, %v371
        %373 = vst [vmem:[%s340 + $0x20] sm:$0xf] %v372
        %v374 = vld [vmem:[%s340 + $0x24] sm:$0x1]
        %v375 = vsel %vm349, %v299, %v374
        %376 = vst [vmem:[%s340 + $0x24] sm:$0x1] %v375
        %v377 = vld [vmem:[%s340 + $0x28] sm:$0xf]
        %v378 = vsel %vm343, %v306, %v377
        %379 = vst [vmem:[%s340 + $0x28] sm:$0xf] %v378
        %v380 = vld [vmem:[%s340 + $0x2c] sm:$0x1]
        %v381 = vsel %vm349, %v307, %v380
        %382 = vst [vmem:[%s340 + $0x2c] sm:$0x1] %v381
        %v383 = vld [vmem:[%s340 + $0x30] sm:$0xf]
        %v384 = vsel %vm343, %v314, %v383
        %385 = vst [vmem:[%s340 + $0x30] sm:$0xf] %v384
        %v386 = vld [vmem:[%s340 + $0x34] sm:$0x1]
        %v387 = vsel %vm349, %v315, %v386
        %388 = vst [vmem:[%s340 + $0x34] sm:$0x1] %v387
        %v389 = vld [vmem:[%s340 + $0x38] sm:$0xf]
        %v390 = vsel %vm343, %v322, %v389
        %391 = vst [vmem:[%s340 + $0x38] sm:$0xf] %v390
        %v392 = vld [vmem:[%s340 + $0x3c] sm:$0x1]
        %v393 = vsel %vm349, %v323, %v392
        %394 = vst [vmem:[%s340 + $0x3c] sm:$0x1] %v393
        %v395 = vld [vmem:[#allocation2] sm:$0xf]
        %v396 = vld [vmem:[#allocation2 + $0x8] sm:$0xf]
        %v397 = vld [vmem:[#allocation2 + $0x10] sm:$0xf]
        %v398 = vld [vmem:[#allocation2 + $0x18] sm:$0xf]
        %v399 = vld [vmem:[#allocation2 + $0x20] sm:$0xf]
        %v400 = vld [vmem:[#allocation2 + $0x28] sm:$0xf]
        %v401 = vld [vmem:[#allocation2 + $0x30] sm:$0xf]
        %v402 = vld [vmem:[#allocation2 + $0x38] sm:$0xf]
        %v403 = vld [vmem:[#allocation2 + $0x4] sm:$0x1]
        %v404 = vld [vmem:[#allocation2 + $0xc] sm:$0x1]
        %v405 = vld [vmem:[#allocation2 + $0x14] sm:$0x1]
        %v406 = vld [vmem:[#allocation2 + $0x1c] sm:$0x1]
        %v407 = vld [vmem:[#allocation2 + $0x24] sm:$0x1]
        %v408 = vld [vmem:[#allocation2 + $0x2c] sm:$0x1]
        %v409 = vld [vmem:[#allocation2 + $0x34] sm:$0x1]
        %v410 = vld [vmem:[#allocation2 + $0x3c] sm:$0x1]
        %vm411 = vsmask.f32 3328
        %vm412 = vsmask.f32 7440
        %vm413 = vmor %vm411, %vm412
        %v415 = vshrl.u32 %v395, 16
        %v417 = vrot.slane %v415, 4
        %v418 = vshll.u32 %v395, 16
        %v420 = vrot.slane %v418, 5
        %v421 = vor.u32 %v417, %v420
        %v422 = vrot.slane %v421, 4
        %v424 = vshll.u32 %v403, 16
        %v426 = vrot.slane %v424, 5
        %v427 = vsel %vm413, %v422, %v426
        %v429 = vshrl.u32 %v396, 16
        %v431 = vrot.slane %v429, 4
        %v432 = vshll.u32 %v396, 16
        %v434 = vrot.slane %v432, 5
        %v435 = vor.u32 %v431, %v434
        %v436 = vrot.slane %v435, 4
        %v438 = vshll.u32 %v404, 16
        %v440 = vrot.slane %v438, 5
        %v441 = vsel %vm413, %v436, %v440
        %v443 = vshrl.u32 %v397, 16
        %v445 = vrot.slane %v443, 4
        %v446 = vshll.u32 %v397, 16
        %v448 = vrot.slane %v446, 5
        %v449 = vor.u32 %v445, %v448
        %v450 = vrot.slane %v449, 4
        %v452 = vshll.u32 %v405, 16
        %v454 = vrot.slane %v452, 5
        %v455 = vsel %vm413, %v450, %v454
        %v457 = vshrl.u32 %v398, 16
        %v459 = vrot.slane %v457, 4
        %v460 = vshll.u32 %v398, 16
        %v462 = vrot.slane %v460, 5
        %v463 = vor.u32 %v459, %v462
        %v464 = vrot.slane %v463, 4
        %v466 = vshll.u32 %v406, 16
        %v468 = vrot.slane %v466, 5
        %v469 = vsel %vm413, %v464, %v468
        %v471 = vshrl.u32 %v399, 16
        %v473 = vrot.slane %v471, 4
        %v474 = vshll.u32 %v399, 16
        %v476 = vrot.slane %v474, 5
        %v477 = vor.u32 %v473, %v476
        %v478 = vrot.slane %v477, 4
        %v480 = vshll.u32 %v407, 16
        %v482 = vrot.slane %v480, 5
        %v483 = vsel %vm413, %v478, %v482
        %v485 = vshrl.u32 %v400, 16
        %v487 = vrot.slane %v485, 4
        %v488 = vshll.u32 %v400, 16
        %v490 = vrot.slane %v488, 5
        %v491 = vor.u32 %v487, %v490
        %v492 = vrot.slane %v491, 4
        %v494 = vshll.u32 %v408, 16
        %v496 = vrot.slane %v494, 5
        %v497 = vsel %vm413, %v492, %v496
        %v499 = vshrl.u32 %v401, 16
        %v501 = vrot.slane %v499, 4
        %v502 = vshll.u32 %v401, 16
        %v504 = vrot.slane %v502, 5
        %v505 = vor.u32 %v501, %v504
        %v506 = vrot.slane %v505, 4
        %v508 = vshll.u32 %v409, 16
        %v510 = vrot.slane %v508, 5
        %v511 = vsel %vm413, %v506, %v510
        %v513 = vshrl.u32 %v402, 16
        %v515 = vrot.slane %v513, 4
        %v516 = vshll.u32 %v402, 16
        %v518 = vrot.slane %v516, 5
        %v519 = vor.u32 %v515, %v518
        %v520 = vrot.slane %v519, 4
        %v522 = vshll.u32 %v410, 16
        %v524 = vrot.slane %v522, 5
        %v525 = vsel %vm413, %v520, %v524
        %v526 = vld [vmem:[#allocation2] sm:$0xe]
        %v527 = vld [vmem:[#allocation2 + $0x8] sm:$0xe]
        %v528 = vld [vmem:[#allocation2 + $0x10] sm:$0xe]
        %v529 = vld [vmem:[#allocation2 + $0x18] sm:$0xe]
        %v530 = vld [vmem:[#allocation2 + $0x20] sm:$0xe]
        %v531 = vld [vmem:[#allocation2 + $0x28] sm:$0xe]
        %v532 = vld [vmem:[#allocation2 + $0x30] sm:$0xe]
        %v533 = vld [vmem:[#allocation2 + $0x38] sm:$0xe]
        %vm550 = vcmask 1042432
        %vm551 = vcmask 1046532
        %vm552 = vmor %vm550, %vm551
        %v553 = vrot.slane %v526, 5
        %v554 = vrot.slane %v553, 4
        %v555 = vrot.slane %v403, 5
        %v556 = vsel %vm552, %v554, %v555
        %v557 = vrot.slane %v527, 5
        %v558 = vrot.slane %v557, 4
        %v559 = vrot.slane %v404, 5
        %v560 = vsel %vm552, %v558, %v559
        %v561 = vrot.slane %v528, 5
        %v562 = vrot.slane %v561, 4
        %v563 = vrot.slane %v405, 5
        %v564 = vsel %vm552, %v562, %v563
        %v565 = vrot.slane %v529, 5
        %v566 = vrot.slane %v565, 4
        %v567 = vrot.slane %v406, 5
        %v568 = vsel %vm552, %v566, %v567
        %v569 = vrot.slane %v530, 5
        %v570 = vrot.slane %v569, 4
        %v571 = vrot.slane %v407, 5
        %v572 = vsel %vm552, %v570, %v571
        %v573 = vrot.slane %v531, 5
        %v574 = vrot.slane %v573, 4
        %v575 = vrot.slane %v408, 5
        %v576 = vsel %vm552, %v574, %v575
        %v577 = vrot.slane %v532, 5
        %v578 = vrot.slane %v577, 4
        %v579 = vrot.slane %v409, 5
        %v580 = vsel %vm552, %v578, %v579
        %v581 = vrot.slane %v533, 5
        %v582 = vrot.slane %v581, 4
        %v583 = vrot.slane %v410, 5
        %v584 = vsel %vm552, %v582, %v583
        %v585 = vld [vmem:[%s340] sm:$0xf]
        %v586 = vld [vmem:[%s340 + $0x8] sm:$0xf]
        %v587 = vld [vmem:[%s340 + $0x10] sm:$0xf]
        %v588 = vld [vmem:[%s340 + $0x18] sm:$0xf]
        %v589 = vld [vmem:[%s340 + $0x20] sm:$0xf]
        %v590 = vld [vmem:[%s340 + $0x28] sm:$0xf]
        %v591 = vld [vmem:[%s340 + $0x30] sm:$0xf]
        %v592 = vld [vmem:[%s340 + $0x38] sm:$0xf]
        %v593 = vld [vmem:[%s340 + $0x4] sm:$0x1]
        %v594 = vld [vmem:[%s340 + $0xc] sm:$0x1]
        %v595 = vld [vmem:[%s340 + $0x14] sm:$0x1]
        %v596 = vld [vmem:[%s340 + $0x1c] sm:$0x1]
        %v597 = vld [vmem:[%s340 + $0x24] sm:$0x1]
        %v598 = vld [vmem:[%s340 + $0x2c] sm:$0x1]
        %v599 = vld [vmem:[%s340 + $0x34] sm:$0x1]
        %v600 = vld [vmem:[%s340 + $0x3c] sm:$0x1]
        %v602 = vshrl.u32 %v585, 16
        %v604 = vrot.slane %v602, 4
        %v605 = vshll.u32 %v585, 16
        %v607 = vrot.slane %v605, 5
        %v608 = vor.u32 %v604, %v607
        %v609 = vrot.slane %v608, 4
        %v611 = vshll.u32 %v593, 16
        %v613 = vrot.slane %v611, 5
        %v614 = vsel %vm413, %v609, %v613
        %v616 = vshrl.u32 %v586, 16
        %v618 = vrot.slane %v616, 4
        %v619 = vshll.u32 %v586, 16
        %v621 = vrot.slane %v619, 5
        %v622 = vor.u32 %v618, %v621
        %v623 = vrot.slane %v622, 4
        %v625 = vshll.u32 %v594, 16
        %v627 = vrot.slane %v625, 5
        %v628 = vsel %vm413, %v623, %v627
        %v630 = vshrl.u32 %v587, 16
        %v632 = vrot.slane %v630, 4
        %v633 = vshll.u32 %v587, 16
        %v635 = vrot.slane %v633, 5
        %v636 = vor.u32 %v632, %v635
        %v637 = vrot.slane %v636, 4
        %v639 = vshll.u32 %v595, 16
        %v641 = vrot.slane %v639, 5
        %v642 = vsel %vm413, %v637, %v641
        %v644 = vshrl.u32 %v588, 16
        %v646 = vrot.slane %v644, 4
        %v647 = vshll.u32 %v588, 16
        %v649 = vrot.slane %v647, 5
        %v650 = vor.u32 %v646, %v649
        %v651 = vrot.slane %v650, 4
        %v653 = vshll.u32 %v596, 16
        %v655 = vrot.slane %v653, 5
        %v656 = vsel %vm413, %v651, %v655
        %v658 = vshrl.u32 %v589, 16
        %v660 = vrot.slane %v658, 4
        %v661 = vshll.u32 %v589, 16
        %v663 = vrot.slane %v661, 5
        %v664 = vor.u32 %v660, %v663
        %v665 = vrot.slane %v664, 4
        %v667 = vshll.u32 %v597, 16
        %v669 = vrot.slane %v667, 5
        %v670 = vsel %vm413, %v665, %v669
        %v672 = vshrl.u32 %v590, 16
        %v674 = vrot.slane %v672, 4
        %v675 = vshll.u32 %v590, 16
        %v677 = vrot.slane %v675, 5
        %v678 = vor.u32 %v674, %v677
        %v679 = vrot.slane %v678, 4
        %v681 = vshll.u32 %v598, 16
        %v683 = vrot.slane %v681, 5
        %v684 = vsel %vm413, %v679, %v683
        %v686 = vshrl.u32 %v591, 16
        %v688 = vrot.slane %v686, 4
        %v689 = vshll.u32 %v591, 16
        %v691 = vrot.slane %v689, 5
        %v692 = vor.u32 %v688, %v691
        %v693 = vrot.slane %v692, 4
        %v695 = vshll.u32 %v599, 16
        %v697 = vrot.slane %v695, 5
        %v698 = vsel %vm413, %v693, %v697
        %v700 = vshrl.u32 %v592, 16
        %v702 = vrot.slane %v700, 4
        %v703 = vshll.u32 %v592, 16
        %v705 = vrot.slane %v703, 5
        %v706 = vor.u32 %v702, %v705
        %v707 = vrot.slane %v706, 4
        %v709 = vshll.u32 %v600, 16
        %v711 = vrot.slane %v709, 5
        %v712 = vsel %vm413, %v707, %v711
        %v713 = vld [vmem:[%s340] sm:$0xe]
        %v714 = vld [vmem:[%s340 + $0x8] sm:$0xe]
        %v715 = vld [vmem:[%s340 + $0x10] sm:$0xe]
        %v716 = vld [vmem:[%s340 + $0x18] sm:$0xe]
        %v717 = vld [vmem:[%s340 + $0x20] sm:$0xe]
        %v718 = vld [vmem:[%s340 + $0x28] sm:$0xe]
        %v719 = vld [vmem:[%s340 + $0x30] sm:$0xe]
        %v720 = vld [vmem:[%s340 + $0x38] sm:$0xe]
        %v737 = vrot.slane %v713, 5
        %v738 = vrot.slane %v737, 4
        %v739 = vrot.slane %v593, 5
        %v740 = vsel %vm552, %v738, %v739
        %v741 = vrot.slane %v714, 5
        %v742 = vrot.slane %v741, 4
        %v743 = vrot.slane %v594, 5
        %v744 = vsel %vm552, %v742, %v743
        %v745 = vrot.slane %v715, 5
        %v746 = vrot.slane %v745, 4
        %v747 = vrot.slane %v595, 5
        %v748 = vsel %vm552, %v746, %v747
        %v749 = vrot.slane %v716, 5
        %v750 = vrot.slane %v749, 4
        %v751 = vrot.slane %v596, 5
        %v752 = vsel %vm552, %v750, %v751
        %v753 = vrot.slane %v717, 5
        %v754 = vrot.slane %v753, 4
        %v755 = vrot.slane %v597, 5
        %v756 = vsel %vm552, %v754, %v755
        %v757 = vrot.slane %v718, 5
        %v758 = vrot.slane %v757, 4
        %v759 = vrot.slane %v598, 5
        %v760 = vsel %vm552, %v758, %v759
        %v761 = vrot.slane %v719, 5
        %v762 = vrot.slane %v761, 4
        %v763 = vrot.slane %v599, 5
        %v764 = vsel %vm552, %v762, %v763
        %v765 = vrot.slane %v720, 5
        %v766 = vrot.slane %v765, 4
        %v767 = vrot.slane %v600, 5
        %v768 = vsel %vm552, %v766, %v767
        %s769 = scalar_lea.vmem [#allocation2], 16
        %v770 = vld [vmem:[%s769] sm:$0xf]
        %v771 = vld [vmem:[%s769 + $0x8] sm:$0xf]
        %v772 = vld [vmem:[%s769 + $0x10] sm:$0xf]
        %v773 = vld [vmem:[%s769 + $0x18] sm:$0xf]
        %v774 = vld [vmem:[%s769 + $0x20] sm:$0xf]
        %v775 = vld [vmem:[%s769 + $0x28] sm:$0xf]
        %v776 = vld [vmem:[%s769 + $0x30] sm:$0xf]
        %v777 = vld [vmem:[%s769 + $0x38] sm:$0xf]
        %v778 = vld [vmem:[%s769 + $0x4] sm:$0x1]
        %v779 = vld [vmem:[%s769 + $0xc] sm:$0x1]
        %v780 = vld [vmem:[%s769 + $0x14] sm:$0x1]
        %v781 = vld [vmem:[%s769 + $0x1c] sm:$0x1]
        %v782 = vld [vmem:[%s769 + $0x24] sm:$0x1]
        %v783 = vld [vmem:[%s769 + $0x2c] sm:$0x1]
        %v784 = vld [vmem:[%s769 + $0x34] sm:$0x1]
        %v785 = vld [vmem:[%s769 + $0x3c] sm:$0x1]
        %v787 = vshrl.u32 %v770, 16
        %v789 = vrot.slane %v787, 4
        %v790 = vshll.u32 %v770, 16
        %v792 = vrot.slane %v790, 5
        %v793 = vor.u32 %v789, %v792
        %v794 = vrot.slane %v793, 4
        %v796 = vshll.u32 %v778, 16
        %v798 = vrot.slane %v796, 5
        %v799 = vsel %vm413, %v794, %v798
        %v801 = vshrl.u32 %v771, 16
        %v803 = vrot.slane %v801, 4
        %v804 = vshll.u32 %v771, 16
        %v806 = vrot.slane %v804, 5
        %v807 = vor.u32 %v803, %v806
        %v808 = vrot.slane %v807, 4
        %v810 = vshll.u32 %v779, 16
        %v812 = vrot.slane %v810, 5
        %v813 = vsel %vm413, %v808, %v812
        %v815 = vshrl.u32 %v772, 16
        %v817 = vrot.slane %v815, 4
        %v818 = vshll.u32 %v772, 16
        %v820 = vrot.slane %v818, 5
        %v821 = vor.u32 %v817, %v820
        %v822 = vrot.slane %v821, 4
        %v824 = vshll.u32 %v780, 16
        %v826 = vrot.slane %v824, 5
        %v827 = vsel %vm413, %v822, %v826
        %v829 = vshrl.u32 %v773, 16
        %v831 = vrot.slane %v829, 4
        %v832 = vshll.u32 %v773, 16
        %v834 = vrot.slane %v832, 5
        %v835 = vor.u32 %v831, %v834
        %v836 = vrot.slane %v835, 4
        %v838 = vshll.u32 %v781, 16
        %v840 = vrot.slane %v838, 5
        %v841 = vsel %vm413, %v836, %v840
        %v843 = vshrl.u32 %v774, 16
        %v845 = vrot.slane %v843, 4
        %v846 = vshll.u32 %v774, 16
        %v848 = vrot.slane %v846, 5
        %v849 = vor.u32 %v845, %v848
        %v850 = vrot.slane %v849, 4
        %v852 = vshll.u32 %v782, 16
        %v854 = vrot.slane %v852, 5
        %v855 = vsel %vm413, %v850, %v854
        %v857 = vshrl.u32 %v775, 16
        %v859 = vrot.slane %v857, 4
        %v860 = vshll.u32 %v775, 16
        %v862 = vrot.slane %v860, 5
        %v863 = vor.u32 %v859, %v862
        %v864 = vrot.slane %v863, 4
        %v866 = vshll.u32 %v783, 16
        %v868 = vrot.slane %v866, 5
        %v869 = vsel %vm413, %v864, %v868
        %v871 = vshrl.u32 %v776, 16
        %v873 = vrot.slane %v871, 4
        %v874 = vshll.u32 %v776, 16
        %v876 = vrot.slane %v874, 5
        %v877 = vor.u32 %v873, %v876
        %v878 = vrot.slane %v877, 4
        %v880 = vshll.u32 %v784, 16
        %v882 = vrot.slane %v880, 5
        %v883 = vsel %vm413, %v878, %v882
        %v885 = vshrl.u32 %v777, 16
        %v887 = vrot.slane %v885, 4
        %v888 = vshll.u32 %v777, 16
        %v890 = vrot.slane %v888, 5
        %v891 = vor.u32 %v887, %v890
        %v892 = vrot.slane %v891, 4
        %v894 = vshll.u32 %v785, 16
        %v896 = vrot.slane %v894, 5
        %v897 = vsel %vm413, %v892, %v896
        %v898 = vld [vmem:[%s769] sm:$0xe]
        %v899 = vld [vmem:[%s769 + $0x8] sm:$0xe]
        %v900 = vld [vmem:[%s769 + $0x10] sm:$0xe]
        %v901 = vld [vmem:[%s769 + $0x18] sm:$0xe]
        %v902 = vld [vmem:[%s769 + $0x20] sm:$0xe]
        %v903 = vld [vmem:[%s769 + $0x28] sm:$0xe]
        %v904 = vld [vmem:[%s769 + $0x30] sm:$0xe]
        %v905 = vld [vmem:[%s769 + $0x38] sm:$0xe]
        %v922 = vrot.slane %v898, 5
        %v923 = vrot.slane %v922, 4
        %v924 = vrot.slane %v778, 5
        %v925 = vsel %vm552, %v923, %v924
        %v926 = vrot.slane %v899, 5
        %v927 = vrot.slane %v926, 4
        %v928 = vrot.slane %v779, 5
        %v929 = vsel %vm552, %v927, %v928
        %v930 = vrot.slane %v900, 5
        %v931 = vrot.slane %v930, 4
        %v932 = vrot.slane %v780, 5
        %v933 = vsel %vm552, %v931, %v932
        %v934 = vrot.slane %v901, 5
        %v935 = vrot.slane %v934, 4
        %v936 = vrot.slane %v781, 5
        %v937 = vsel %vm552, %v935, %v936
        %v938 = vrot.slane %v902, 5
        %v939 = vrot.slane %v938, 4
        %v940 = vrot.slane %v782, 5
        %v941 = vsel %vm552, %v939, %v940
        %v942 = vrot.slane %v903, 5
        %v943 = vrot.slane %v942, 4
        %v944 = vrot.slane %v783, 5
        %v945 = vsel %vm552, %v943, %v944
        %v946 = vrot.slane %v904, 5
        %v947 = vrot.slane %v946, 4
        %v948 = vrot.slane %v784, 5
        %v949 = vsel %vm552, %v947, %v948
        %v950 = vrot.slane %v905, 5
        %v951 = vrot.slane %v950, 4
        %v952 = vrot.slane %v785, 5
        %v953 = vsel %vm552, %v951, %v952
        %v962 = vunpack.c.l.b16 %v395
        %v963 = vunpack.c.l.b16 %v396
        %v964 = vunpack.c.l.b16 %v397
        %v965 = vunpack.c.l.b16 %v398
        %v966 = vunpack.c.l.b16 %v399
        %v967 = vunpack.c.l.b16 %v400
        %v968 = vunpack.c.l.b16 %v401
        %v969 = vunpack.c.l.b16 %v402
        %v970 = vpack.c.b16 %v963, %v962
        %v971 = vpack.c.b16 %v965, %v964
        %v972 = vpack.c.b16 %v967, %v966
        %v973 = vpack.c.b16 %v969, %v968
        %v978 = vunpack.c.l.b16 %v427
        %v979 = vunpack.c.l.b16 %v441
        %v980 = vunpack.c.l.b16 %v455
        %v981 = vunpack.c.l.b16 %v469
        %v982 = vunpack.c.l.b16 %v483
        %v983 = vunpack.c.l.b16 %v497
        %v984 = vunpack.c.l.b16 %v511
        %v985 = vunpack.c.l.b16 %v525
        %v986 = vpack.c.b16 %v979, %v978
        %v987 = vpack.c.b16 %v981, %v980
        %v988 = vpack.c.b16 %v983, %v982
        %v989 = vpack.c.b16 %v985, %v984
        %v994 = vunpack.c.l.b16 %v556
        %v995 = vunpack.c.l.b16 %v560
        %v996 = vunpack.c.l.b16 %v564
        %v997 = vunpack.c.l.b16 %v568
        %v998 = vunpack.c.l.b16 %v572
        %v999 = vunpack.c.l.b16 %v576
        %v1000 = vunpack.c.l.b16 %v580
        %v1001 = vunpack.c.l.b16 %v584
        %v1002 = vpack.c.b16 %v995, %v994
        %v1003 = vpack.c.b16 %v997, %v996
        %v1004 = vpack.c.b16 %v999, %v998
        %v1005 = vpack.c.b16 %v1001, %v1000
        %v1018 = vunpack.c.l.b16 %v585
        %v1019 = vunpack.c.l.b16 %v586
        %v1020 = vunpack.c.l.b16 %v587
        %v1021 = vunpack.c.l.b16 %v588
        %v1022 = vunpack.c.l.b16 %v589
        %v1023 = vunpack.c.l.b16 %v590
        %v1024 = vunpack.c.l.b16 %v591
        %v1025 = vunpack.c.l.b16 %v592
        %v1026 = vpack.c.b16 %v1019, %v1018
        %v1027 = vpack.c.b16 %v1021, %v1020
        %v1028 = vpack.c.b16 %v1023, %v1022
        %v1029 = vpack.c.b16 %v1025, %v1024
        %v1034 = vunpack.c.l.b16 %v614
        %v1035 = vunpack.c.l.b16 %v628
        %v1036 = vunpack.c.l.b16 %v642
        %v1037 = vunpack.c.l.b16 %v656
        %v1038 = vunpack.c.l.b16 %v670
        %v1039 = vunpack.c.l.b16 %v684
        %v1040 = vunpack.c.l.b16 %v698
        %v1041 = vunpack.c.l.b16 %v712
        %v1042 = vpack.c.b16 %v1035, %v1034
        %v1043 = vpack.c.b16 %v1037, %v1036
        %v1044 = vpack.c.b16 %v1039, %v1038
        %v1045 = vpack.c.b16 %v1041, %v1040
        %v1050 = vunpack.c.l.b16 %v740
        %v1051 = vunpack.c.l.b16 %v744
        %v1052 = vunpack.c.l.b16 %v748
        %v1053 = vunpack.c.l.b16 %v752
        %v1054 = vunpack.c.l.b16 %v756
        %v1055 = vunpack.c.l.b16 %v760
        %v1056 = vunpack.c.l.b16 %v764
        %v1057 = vunpack.c.l.b16 %v768
        %v1058 = vpack.c.b16 %v1051, %v1050
        %v1059 = vpack.c.b16 %v1053, %v1052
        %v1060 = vpack.c.b16 %v1055, %v1054
        %v1061 = vpack.c.b16 %v1057, %v1056
        %v1074 = vunpack.c.l.b16 %v770
        %v1075 = vunpack.c.l.b16 %v771
        %v1076 = vunpack.c.l.b16 %v772
        %v1077 = vunpack.c.l.b16 %v773
        %v1078 = vunpack.c.l.b16 %v774
        %v1079 = vunpack.c.l.b16 %v775
        %v1080 = vunpack.c.l.b16 %v776
        %v1081 = vunpack.c.l.b16 %v777
        %v1082 = vpack.c.b16 %v1075, %v1074
        %v1083 = vpack.c.b16 %v1077, %v1076
        %v1084 = vpack.c.b16 %v1079, %v1078
        %v1085 = vpack.c.b16 %v1081, %v1080
        %v1090 = vunpack.c.l.b16 %v799
        %v1091 = vunpack.c.l.b16 %v813
        %v1092 = vunpack.c.l.b16 %v827
        %v1093 = vunpack.c.l.b16 %v841
        %v1094 = vunpack.c.l.b16 %v855
        %v1095 = vunpack.c.l.b16 %v869
        %v1096 = vunpack.c.l.b16 %v883
        %v1097 = vunpack.c.l.b16 %v897
        %v1098 = vpack.c.b16 %v1091, %v1090
        %v1099 = vpack.c.b16 %v1093, %v1092
        %v1100 = vpack.c.b16 %v1095, %v1094
        %v1101 = vpack.c.b16 %v1097, %v1096
        %v1106 = vunpack.c.l.b16 %v925
        %v1107 = vunpack.c.l.b16 %v929
        %v1108 = vunpack.c.l.b16 %v933
        %v1109 = vunpack.c.l.b16 %v937
        %v1110 = vunpack.c.l.b16 %v941
        %v1111 = vunpack.c.l.b16 %v945
        %v1112 = vunpack.c.l.b16 %v949
        %v1113 = vunpack.c.l.b16 %v953
        %v1114 = vpack.c.b16 %v1107, %v1106
        %v1115 = vpack.c.b16 %v1109, %v1108
        %v1116 = vpack.c.b16 %v1111, %v1110
        %v1117 = vpack.c.b16 %v1113, %v1112
        %v1122 = vld [vmem:[#allocation6] sm:$0xff]
        %v1123 = vld [vmem:[#allocation6 + $0x8] sm:$0xff]
        %v1124 = vld [vmem:[#allocation6 + $0x10] sm:$0xff]
        %v1125 = vld [vmem:[#allocation6 + $0x18] sm:$0xff]
        %v1126 = vld [vmem:[#allocation6 + $0x20] sm:$0xff]
        %v1127 = vld [vmem:[#allocation6 + $0x28] sm:$0xff]
        %v1128 = vld [vmem:[#allocation6 + $0x30] sm:$0xff]
        %v1129 = vld [vmem:[#allocation6 + $0x38] sm:$0xff]
        %v1130 = vld [vmem:[#allocation6 + $0x40] sm:$0xff]
        %v1131 = vld [vmem:[#allocation6 + $0x48] sm:$0xff]
        %v1132 = vld [vmem:[#allocation6 + $0x50] sm:$0xff]
        %v1133 = vld [vmem:[#allocation6 + $0x58] sm:$0xff]
        %v1134 = vld [vmem:[#allocation6 + $0x60] sm:$0xff]
        %v1135 = vld [vmem:[#allocation6 + $0x68] sm:$0xff]
        %v1136 = vld [vmem:[#allocation6 + $0x70] sm:$0xff]
        %v1137 = vld [vmem:[#allocation6 + $0x78] sm:$0xff]
        %v1138 = vld [vmem:[#allocation6 + $0x80] sm:$0xff]
        %v1139 = vld [vmem:[#allocation6 + $0x88] sm:$0xff]
        %v1140 = vld [vmem:[#allocation6 + $0x90] sm:$0xff]
        %v1141 = vld [vmem:[#allocation6 + $0x98] sm:$0xff]
        %v1142 = vld [vmem:[#allocation6 + $0xa0] sm:$0xff]
        %v1143 = vld [vmem:[#allocation6 + $0xa8] sm:$0xff]
        %v1144 = vld [vmem:[#allocation6 + $0xb0] sm:$0xff]
        %v1145 = vld [vmem:[#allocation6 + $0xb8] sm:$0xff]
        %v1146 = vld [vmem:[#allocation6 + $0xc0] sm:$0xff]
        %v1147 = vld [vmem:[#allocation6 + $0xc8] sm:$0xff]
        %v1148 = vld [vmem:[#allocation6 + $0xd0] sm:$0xff]
        %v1149 = vld [vmem:[#allocation6 + $0xd8] sm:$0xff]
        %v1150 = vld [vmem:[#allocation6 + $0xe0] sm:$0xff]
        %v1151 = vld [vmem:[#allocation6 + $0xe8] sm:$0xff]
        %v1152 = vld [vmem:[#allocation6 + $0xf0] sm:$0xff]
        %v1153 = vld [vmem:[#allocation6 + $0xf8] sm:$0xff]
        %v1154 = vld [vmem:[#allocation6 + $0x100] sm:$0xff]
        %v1155 = vld [vmem:[#allocation6 + $0x108] sm:$0xff]
        %v1156 = vld [vmem:[#allocation6 + $0x110] sm:$0xff]
        %v1157 = vld [vmem:[#allocation6 + $0x118] sm:$0xff]
        %v1158 = vld [vmem:[#allocation6 + $0x120] sm:$0xff]
        %v1159 = vld [vmem:[#allocation6 + $0x128] sm:$0xff]
        %v1160 = vld [vmem:[#allocation6 + $0x130] sm:$0xff]
        %v1161 = vld [vmem:[#allocation6 + $0x138] sm:$0xff]
        %v1162 = vld [vmem:[#allocation6 + $0x140] sm:$0xff]
        %v1163 = vld [vmem:[#allocation6 + $0x148] sm:$0xff]
        %v1164 = vld [vmem:[#allocation6 + $0x150] sm:$0xff]
        %v1165 = vld [vmem:[#allocation6 + $0x158] sm:$0xff]
        %v1166 = vld [vmem:[#allocation6 + $0x160] sm:$0xff]
        %v1167 = vld [vmem:[#allocation6 + $0x168] sm:$0xff]
        %v1168 = vld [vmem:[#allocation6 + $0x170] sm:$0xff]
        %v1169 = vld [vmem:[#allocation6 + $0x178] sm:$0xff]
        %v1170 = vld [vmem:[#allocation6 + $0x180] sm:$0xff]
        %v1171 = vld [vmem:[#allocation6 + $0x188] sm:$0xff]
        %v1172 = vld [vmem:[#allocation6 + $0x190] sm:$0xff]
        %v1173 = vld [vmem:[#allocation6 + $0x198] sm:$0xff]
        %v1174 = vld [vmem:[#allocation6 + $0x1a0] sm:$0xff]
        %v1175 = vld [vmem:[#allocation6 + $0x1a8] sm:$0xff]
        %v1176 = vld [vmem:[#allocation6 + $0x1b0] sm:$0xff]
        %v1177 = vld [vmem:[#allocation6 + $0x1b8] sm:$0xff]
        %v1178 = vld [vmem:[#allocation6 + $0x1c0] sm:$0xff]
        %v1179 = vld [vmem:[#allocation6 + $0x1c8] sm:$0xff]
        %v1180 = vld [vmem:[#allocation6 + $0x1d0] sm:$0xff]
        %v1181 = vld [vmem:[#allocation6 + $0x1d8] sm:$0xff]
        %v1182 = vld [vmem:[#allocation6 + $0x1e0] sm:$0xff]
        %v1183 = vld [vmem:[#allocation6 + $0x1e8] sm:$0xff]
        %v1184 = vld [vmem:[#allocation6 + $0x1f0] sm:$0xff]
        %v1185 = vld [vmem:[#allocation6 + $0x1f8] sm:$0xff]
        %v1186 = vld [vmem:[#allocation6 + $0x200] sm:$0xff]
        %v1187 = vld [vmem:[#allocation6 + $0x208] sm:$0xff]
        %v1188 = vld [vmem:[#allocation6 + $0x210] sm:$0xff]
        %v1189 = vld [vmem:[#allocation6 + $0x218] sm:$0xff]
        %v1190 = vld [vmem:[#allocation6 + $0x220] sm:$0xff]
        %v1191 = vld [vmem:[#allocation6 + $0x228] sm:$0xff]
        %v1192 = vld [vmem:[#allocation6 + $0x230] sm:$0xff]
        %v1193 = vld [vmem:[#allocation6 + $0x238] sm:$0xff]
        %v1194 = vld [vmem:[#allocation6 + $0x240] sm:$0xff]
        %v1195 = vld [vmem:[#allocation6 + $0x248] sm:$0xff]
        %v1196 = vld [vmem:[#allocation6 + $0x250] sm:$0xff]
        %v1197 = vld [vmem:[#allocation6 + $0x258] sm:$0xff]
        %v1198 = vld [vmem:[#allocation6 + $0x260] sm:$0xff]
        %v1199 = vld [vmem:[#allocation6 + $0x268] sm:$0xff]
        %v1200 = vld [vmem:[#allocation6 + $0x270] sm:$0xff]
        %v1201 = vld [vmem:[#allocation6 + $0x278] sm:$0xff]
        %v1202 = vld [vmem:[#allocation6 + $0x280] sm:$0xff]
        %v1203 = vld [vmem:[#allocation6 + $0x288] sm:$0xff]
        %v1204 = vld [vmem:[#allocation6 + $0x290] sm:$0xff]
        %v1205 = vld [vmem:[#allocation6 + $0x298] sm:$0xff]
        %v1206 = vld [vmem:[#allocation6 + $0x2a0] sm:$0xff]
        %v1207 = vld [vmem:[#allocation6 + $0x2a8] sm:$0xff]
        %v1208 = vld [vmem:[#allocation6 + $0x2b0] sm:$0xff]
        %v1209 = vld [vmem:[#allocation6 + $0x2b8] sm:$0xff]
        %v1210 = vld [vmem:[#allocation6 + $0x2c0] sm:$0xff]
        %v1211 = vld [vmem:[#allocation6 + $0x2c8] sm:$0xff]
        %v1212 = vld [vmem:[#allocation6 + $0x2d0] sm:$0xff]
        %v1213 = vld [vmem:[#allocation6 + $0x2d8] sm:$0xff]
        %v1214 = vld [vmem:[#allocation6 + $0x2e0] sm:$0xff]
        %v1215 = vld [vmem:[#allocation6 + $0x2e8] sm:$0xff]
        %v1216 = vld [vmem:[#allocation6 + $0x2f0] sm:$0xff]
        %v1217 = vld [vmem:[#allocation6 + $0x2f8] sm:$0xff]
        %v1218 = vld [vmem:[#allocation6 + $0x300] sm:$0xff]
        %v1219 = vld [vmem:[#allocation6 + $0x308] sm:$0xff]
        %v1220 = vld [vmem:[#allocation6 + $0x310] sm:$0xff]
        %v1221 = vld [vmem:[#allocation6 + $0x318] sm:$0xff]
        %v1222 = vld [vmem:[#allocation6 + $0x320] sm:$0xff]
        %v1223 = vld [vmem:[#allocation6 + $0x328] sm:$0xff]
        %v1224 = vld [vmem:[#allocation6 + $0x330] sm:$0xff]
        %v1225 = vld [vmem:[#allocation6 + $0x338] sm:$0xff]
        %v1226 = vld [vmem:[#allocation6 + $0x340] sm:$0xff]
        %v1227 = vld [vmem:[#allocation6 + $0x348] sm:$0xff]
        %v1228 = vld [vmem:[#allocation6 + $0x350] sm:$0xff]
        %v1229 = vld [vmem:[#allocation6 + $0x358] sm:$0xff]
        %v1230 = vld [vmem:[#allocation6 + $0x360] sm:$0xff]
        %v1231 = vld [vmem:[#allocation6 + $0x368] sm:$0xff]
        %v1232 = vld [vmem:[#allocation6 + $0x370] sm:$0xff]
        %v1233 = vld [vmem:[#allocation6 + $0x378] sm:$0xff]
        %v1234 = vld [vmem:[#allocation6 + $0x380] sm:$0xff]
        %v1235 = vld [vmem:[#allocation6 + $0x388] sm:$0xff]
        %v1236 = vld [vmem:[#allocation6 + $0x390] sm:$0xff]
        %v1237 = vld [vmem:[#allocation6 + $0x398] sm:$0xff]
        %v1238 = vld [vmem:[#allocation6 + $0x3a0] sm:$0xff]
        %v1239 = vld [vmem:[#allocation6 + $0x3a8] sm:$0xff]
        %v1240 = vld [vmem:[#allocation6 + $0x3b0] sm:$0xff]
        %v1241 = vld [vmem:[#allocation6 + $0x3b8] sm:$0xff]
        %v1242 = vld [vmem:[#allocation6 + $0x3c0] sm:$0xff]
        %v1243 = vld [vmem:[#allocation6 + $0x3c8] sm:$0xff]
        %v1244 = vld [vmem:[#allocation6 + $0x3d0] sm:$0xff]
        %v1245 = vld [vmem:[#allocation6 + $0x3d8] sm:$0xff]
        %v1246 = vld [vmem:[#allocation6 + $0x3e0] sm:$0xff]
        %v1247 = vld [vmem:[#allocation6 + $0x3e8] sm:$0xff]
        %v1248 = vld [vmem:[#allocation6 + $0x3f0] sm:$0xff]
        %v1249 = vld [vmem:[#allocation6 + $0x3f8] sm:$0xff]
        %v1250 = vld [vmem:[#allocation6 + $0x400] sm:$0xff]
        %v1251 = vld [vmem:[#allocation6 + $0x408] sm:$0xff]
        %v1252 = vld [vmem:[#allocation6 + $0x410] sm:$0xff]
        %v1253 = vld [vmem:[#allocation6 + $0x418] sm:$0xff]
        %v1254 = vld [vmem:[#allocation6 + $0x420] sm:$0xff]
        %v1255 = vld [vmem:[#allocation6 + $0x428] sm:$0xff]
        %v1256 = vld [vmem:[#allocation6 + $0x430] sm:$0xff]
        %v1257 = vld [vmem:[#allocation6 + $0x438] sm:$0xff]
        %v1258 = vld [vmem:[#allocation6 + $0x440] sm:$0xff]
        %v1259 = vld [vmem:[#allocation6 + $0x448] sm:$0xff]
        %v1260 = vld [vmem:[#allocation6 + $0x450] sm:$0xff]
        %v1261 = vld [vmem:[#allocation6 + $0x458] sm:$0xff]
        %v1262 = vld [vmem:[#allocation6 + $0x460] sm:$0xff]
        %v1263 = vld [vmem:[#allocation6 + $0x468] sm:$0xff]
        %v1264 = vld [vmem:[#allocation6 + $0x470] sm:$0xff]
        %v1265 = vld [vmem:[#allocation6 + $0x478] sm:$0xff]
        %v1410 = vunpack.c.l.b16 %v1122
        %v1411 = vunpack.c.h.b16 %v1122
        %v1412 = vunpack.c.l.b16 %v1123
        %v1413 = vunpack.c.h.b16 %v1123
        %v1414 = vunpack.c.l.b16 %v1124
        %v1415 = vunpack.c.h.b16 %v1124
        %v1416 = vunpack.c.l.b16 %v1125
        %v1417 = vunpack.c.h.b16 %v1125
        %v1418 = vunpack.c.l.b16 %v1126
        %v1419 = vunpack.c.h.b16 %v1126
        %v1420 = vunpack.c.l.b16 %v1127
        %v1421 = vunpack.c.h.b16 %v1127
        %v1422 = vunpack.c.l.b16 %v1128
        %v1423 = vunpack.c.h.b16 %v1128
        %v1424 = vunpack.c.l.b16 %v1129
        %v1425 = vunpack.c.h.b16 %v1129
        %v1426 = vunpack.c.l.b16 %v1130
        %v1427 = vunpack.c.h.b16 %v1130
        %v1428 = vunpack.c.l.b16 %v1131
        %v1429 = vunpack.c.h.b16 %v1131
        %v1430 = vunpack.c.l.b16 %v1132
        %v1431 = vunpack.c.h.b16 %v1132
        %v1432 = vunpack.c.l.b16 %v1133
        %v1433 = vunpack.c.h.b16 %v1133
        %v1434 = vunpack.c.l.b16 %v1134
        %v1435 = vunpack.c.h.b16 %v1134
        %v1436 = vunpack.c.l.b16 %v1135
        %v1437 = vunpack.c.h.b16 %v1135
        %v1438 = vunpack.c.l.b16 %v1136
        %v1439 = vunpack.c.h.b16 %v1136
        %v1440 = vunpack.c.l.b16 %v1137
        %v1441 = vunpack.c.h.b16 %v1137
        %v1442 = vunpack.c.l.b16 %v1138
        %v1443 = vunpack.c.h.b16 %v1138
        %v1444 = vunpack.c.l.b16 %v1139
        %v1445 = vunpack.c.h.b16 %v1139
        %v1446 = vunpack.c.l.b16 %v1140
        %v1447 = vunpack.c.h.b16 %v1140
        %v1448 = vunpack.c.l.b16 %v1141
        %v1449 = vunpack.c.h.b16 %v1141
        %v1450 = vunpack.c.l.b16 %v1142
        %v1451 = vunpack.c.h.b16 %v1142
        %v1452 = vunpack.c.l.b16 %v1143
        %v1453 = vunpack.c.h.b16 %v1143
        %v1454 = vunpack.c.l.b16 %v1144
        %v1455 = vunpack.c.h.b16 %v1144
        %v1456 = vunpack.c.l.b16 %v1145
        %v1457 = vunpack.c.h.b16 %v1145
        %v1458 = vunpack.c.l.b16 %v1146
        %v1459 = vunpack.c.h.b16 %v1146
        %v1460 = vunpack.c.l.b16 %v1147
        %v1461 = vunpack.c.h.b16 %v1147
        %v1462 = vunpack.c.l.b16 %v1148
        %v1463 = vunpack.c.h.b16 %v1148
        %v1464 = vunpack.c.l.b16 %v1149
        %v1465 = vunpack.c.h.b16 %v1149
        %v1466 = vunpack.c.l.b16 %v1150
        %v1467 = vunpack.c.h.b16 %v1150
        %v1468 = vunpack.c.l.b16 %v1151
        %v1469 = vunpack.c.h.b16 %v1151
        %v1470 = vunpack.c.l.b16 %v1152
        %v1471 = vunpack.c.h.b16 %v1152
        %v1472 = vunpack.c.l.b16 %v1153
        %v1473 = vunpack.c.h.b16 %v1153
        %v1474 = vunpack.c.l.b16 %v1154
        %v1475 = vunpack.c.h.b16 %v1154
        %v1476 = vunpack.c.l.b16 %v1155
        %v1477 = vunpack.c.h.b16 %v1155
        %v1478 = vunpack.c.l.b16 %v1156
        %v1479 = vunpack.c.h.b16 %v1156
        %v1480 = vunpack.c.l.b16 %v1157
        %v1481 = vunpack.c.h.b16 %v1157
        %v1482 = vunpack.c.l.b16 %v1158
        %v1483 = vunpack.c.h.b16 %v1158
        %v1484 = vunpack.c.l.b16 %v1159
        %v1485 = vunpack.c.h.b16 %v1159
        %v1486 = vunpack.c.l.b16 %v1160
        %v1487 = vunpack.c.h.b16 %v1160
        %v1488 = vunpack.c.l.b16 %v1161
        %v1489 = vunpack.c.h.b16 %v1161
        %v1490 = vunpack.c.l.b16 %v1162
        %v1491 = vunpack.c.h.b16 %v1162
        %v1492 = vunpack.c.l.b16 %v1163
        %v1493 = vunpack.c.h.b16 %v1163
        %v1494 = vunpack.c.l.b16 %v1164
        %v1495 = vunpack.c.h.b16 %v1164
        %v1496 = vunpack.c.l.b16 %v1165
        %v1497 = vunpack.c.h.b16 %v1165
        %v1498 = vunpack.c.l.b16 %v1166
        %v1499 = vunpack.c.h.b16 %v1166
        %v1500 = vunpack.c.l.b16 %v1167
        %v1501 = vunpack.c.h.b16 %v1167
        %v1502 = vunpack.c.l.b16 %v1168
        %v1503 = vunpack.c.h.b16 %v1168
        %v1504 = vunpack.c.l.b16 %v1169
        %v1505 = vunpack.c.h.b16 %v1169
        %v1506 = vunpack.c.l.b16 %v1170
        %v1507 = vunpack.c.h.b16 %v1170
        %v1508 = vunpack.c.l.b16 %v1171
        %v1509 = vunpack.c.h.b16 %v1171
        %v1510 = vunpack.c.l.b16 %v1172
        %v1511 = vunpack.c.h.b16 %v1172
        %v1512 = vunpack.c.l.b16 %v1173
        %v1513 = vunpack.c.h.b16 %v1173
        %v1514 = vunpack.c.l.b16 %v1174
        %v1515 = vunpack.c.h.b16 %v1174
        %v1516 = vunpack.c.l.b16 %v1175
        %v1517 = vunpack.c.h.b16 %v1175
        %v1518 = vunpack.c.l.b16 %v1176
        %v1519 = vunpack.c.h.b16 %v1176
        %v1520 = vunpack.c.l.b16 %v1177
        %v1521 = vunpack.c.h.b16 %v1177
        %v1522 = vunpack.c.l.b16 %v1178
        %v1523 = vunpack.c.h.b16 %v1178
        %v1524 = vunpack.c.l.b16 %v1179
        %v1525 = vunpack.c.h.b16 %v1179
        %v1526 = vunpack.c.l.b16 %v1180
        %v1527 = vunpack.c.h.b16 %v1180
        %v1528 = vunpack.c.l.b16 %v1181
        %v1529 = vunpack.c.h.b16 %v1181
        %v1530 = vunpack.c.l.b16 %v1182
        %v1531 = vunpack.c.h.b16 %v1182
        %v1532 = vunpack.c.l.b16 %v1183
        %v1533 = vunpack.c.h.b16 %v1183
        %v1534 = vunpack.c.l.b16 %v1184
        %v1535 = vunpack.c.h.b16 %v1184
        %v1536 = vunpack.c.l.b16 %v1185
        %v1537 = vunpack.c.h.b16 %v1185
        %v1538 = vunpack.c.l.b16 %v1186
        %v1539 = vunpack.c.h.b16 %v1186
        %v1540 = vunpack.c.l.b16 %v1187
        %v1541 = vunpack.c.h.b16 %v1187
        %v1542 = vunpack.c.l.b16 %v1188
        %v1543 = vunpack.c.h.b16 %v1188
        %v1544 = vunpack.c.l.b16 %v1189
        %v1545 = vunpack.c.h.b16 %v1189
        %v1546 = vunpack.c.l.b16 %v1190
        %v1547 = vunpack.c.h.b16 %v1190
        %v1548 = vunpack.c.l.b16 %v1191
        %v1549 = vunpack.c.h.b16 %v1191
        %v1550 = vunpack.c.l.b16 %v1192
        %v1551 = vunpack.c.h.b16 %v1192
        %v1552 = vunpack.c.l.b16 %v1193
        %v1553 = vunpack.c.h.b16 %v1193
        %v1554 = vunpack.c.l.b16 %v1194
        %v1555 = vunpack.c.h.b16 %v1194
        %v1556 = vunpack.c.l.b16 %v1195
        %v1557 = vunpack.c.h.b16 %v1195
        %v1558 = vunpack.c.l.b16 %v1196
        %v1559 = vunpack.c.h.b16 %v1196
        %v1560 = vunpack.c.l.b16 %v1197
        %v1561 = vunpack.c.h.b16 %v1197
        %v1562 = vunpack.c.l.b16 %v1198
        %v1563 = vunpack.c.h.b16 %v1198
        %v1564 = vunpack.c.l.b16 %v1199
        %v1565 = vunpack.c.h.b16 %v1199
        %v1566 = vunpack.c.l.b16 %v1200
        %v1567 = vunpack.c.h.b16 %v1200
        %v1568 = vunpack.c.l.b16 %v1201
        %v1569 = vunpack.c.h.b16 %v1201
        %v1570 = vunpack.c.l.b16 %v1202
        %v1571 = vunpack.c.h.b16 %v1202
        %v1572 = vunpack.c.l.b16 %v1203
        %v1573 = vunpack.c.h.b16 %v1203
        %v1574 = vunpack.c.l.b16 %v1204
        %v1575 = vunpack.c.h.b16 %v1204
        %v1576 = vunpack.c.l.b16 %v1205
        %v1577 = vunpack.c.h.b16 %v1205
        %v1578 = vunpack.c.l.b16 %v1206
        %v1579 = vunpack.c.h.b16 %v1206
        %v1580 = vunpack.c.l.b16 %v1207
        %v1581 = vunpack.c.h.b16 %v1207
        %v1582 = vunpack.c.l.b16 %v1208
        %v1583 = vunpack.c.h.b16 %v1208
        %v1584 = vunpack.c.l.b16 %v1209
        %v1585 = vunpack.c.h.b16 %v1209
        %v1586 = vunpack.c.l.b16 %v1210
        %v1587 = vunpack.c.h.b16 %v1210
        %v1588 = vunpack.c.l.b16 %v1211
        %v1589 = vunpack.c.h.b16 %v1211
        %v1590 = vunpack.c.l.b16 %v1212
        %v1591 = vunpack.c.h.b16 %v1212
        %v1592 = vunpack.c.l.b16 %v1213
        %v1593 = vunpack.c.h.b16 %v1213
        %v1594 = vunpack.c.l.b16 %v1214
        %v1595 = vunpack.c.h.b16 %v1214
        %v1596 = vunpack.c.l.b16 %v1215
        %v1597 = vunpack.c.h.b16 %v1215
        %v1598 = vunpack.c.l.b16 %v1216
        %v1599 = vunpack.c.h.b16 %v1216
        %v1600 = vunpack.c.l.b16 %v1217
        %v1601 = vunpack.c.h.b16 %v1217
        %v1602 = vunpack.c.l.b16 %v1218
        %v1603 = vunpack.c.h.b16 %v1218
        %v1604 = vunpack.c.l.b16 %v1219
        %v1605 = vunpack.c.h.b16 %v1219
        %v1606 = vunpack.c.l.b16 %v1220
        %v1607 = vunpack.c.h.b16 %v1220
        %v1608 = vunpack.c.l.b16 %v1221
        %v1609 = vunpack.c.h.b16 %v1221
        %v1610 = vunpack.c.l.b16 %v1222
        %v1611 = vunpack.c.h.b16 %v1222
        %v1612 = vunpack.c.l.b16 %v1223
        %v1613 = vunpack.c.h.b16 %v1223
        %v1614 = vunpack.c.l.b16 %v1224
        %v1615 = vunpack.c.h.b16 %v1224
        %v1616 = vunpack.c.l.b16 %v1225
        %v1617 = vunpack.c.h.b16 %v1225
        %v1618 = vunpack.c.l.b16 %v1226
        %v1619 = vunpack.c.h.b16 %v1226
        %v1620 = vunpack.c.l.b16 %v1227
        %v1621 = vunpack.c.h.b16 %v1227
        %v1622 = vunpack.c.l.b16 %v1228
        %v1623 = vunpack.c.h.b16 %v1228
        %v1624 = vunpack.c.l.b16 %v1229
        %v1625 = vunpack.c.h.b16 %v1229
        %v1626 = vunpack.c.l.b16 %v1230
        %v1627 = vunpack.c.h.b16 %v1230
        %v1628 = vunpack.c.l.b16 %v1231
        %v1629 = vunpack.c.h.b16 %v1231
        %v1630 = vunpack.c.l.b16 %v1232
        %v1631 = vunpack.c.h.b16 %v1232
        %v1632 = vunpack.c.l.b16 %v1233
        %v1633 = vunpack.c.h.b16 %v1233
        %v1634 = vunpack.c.l.b16 %v1234
        %v1635 = vunpack.c.h.b16 %v1234
        %v1636 = vunpack.c.l.b16 %v1235
        %v1637 = vunpack.c.h.b16 %v1235
        %v1638 = vunpack.c.l.b16 %v1236
        %v1639 = vunpack.c.h.b16 %v1236
        %v1640 = vunpack.c.l.b16 %v1237
        %v1641 = vunpack.c.h.b16 %v1237
        %v1642 = vunpack.c.l.b16 %v1238
        %v1643 = vunpack.c.h.b16 %v1238
        %v1644 = vunpack.c.l.b16 %v1239
        %v1645 = vunpack.c.h.b16 %v1239
        %v1646 = vunpack.c.l.b16 %v1240
        %v1647 = vunpack.c.h.b16 %v1240
        %v1648 = vunpack.c.l.b16 %v1241
        %v1649 = vunpack.c.h.b16 %v1241
        %v1650 = vunpack.c.l.b16 %v1242
        %v1651 = vunpack.c.h.b16 %v1242
        %v1652 = vunpack.c.l.b16 %v1243
        %v1653 = vunpack.c.h.b16 %v1243
        %v1654 = vunpack.c.l.b16 %v1244
        %v1655 = vunpack.c.h.b16 %v1244
        %v1656 = vunpack.c.l.b16 %v1245
        %v1657 = vunpack.c.h.b16 %v1245
        %v1658 = vunpack.c.l.b16 %v1246
        %v1659 = vunpack.c.h.b16 %v1246
        %v1660 = vunpack.c.l.b16 %v1247
        %v1661 = vunpack.c.h.b16 %v1247
        %v1662 = vunpack.c.l.b16 %v1248
        %v1663 = vunpack.c.h.b16 %v1248
        %v1664 = vunpack.c.l.b16 %v1249
        %v1665 = vunpack.c.h.b16 %v1249
        %v1666 = vunpack.c.l.b16 %v1250
        %v1667 = vunpack.c.h.b16 %v1250
        %v1668 = vunpack.c.l.b16 %v1251
        %v1669 = vunpack.c.h.b16 %v1251
        %v1670 = vunpack.c.l.b16 %v1252
        %v1671 = vunpack.c.h.b16 %v1252
        %v1672 = vunpack.c.l.b16 %v1253
        %v1673 = vunpack.c.h.b16 %v1253
        %v1674 = vunpack.c.l.b16 %v1254
        %v1675 = vunpack.c.h.b16 %v1254
        %v1676 = vunpack.c.l.b16 %v1255
        %v1677 = vunpack.c.h.b16 %v1255
        %v1678 = vunpack.c.l.b16 %v1256
        %v1679 = vunpack.c.h.b16 %v1256
        %v1680 = vunpack.c.l.b16 %v1257
        %v1681 = vunpack.c.h.b16 %v1257
        %v1682 = vunpack.c.l.b16 %v1258
        %v1683 = vunpack.c.h.b16 %v1258
        %v1684 = vunpack.c.l.b16 %v1259
        %v1685 = vunpack.c.h.b16 %v1259
        %v1686 = vunpack.c.l.b16 %v1260
        %v1687 = vunpack.c.h.b16 %v1260
        %v1688 = vunpack.c.l.b16 %v1261
        %v1689 = vunpack.c.h.b16 %v1261
        %v1690 = vunpack.c.l.b16 %v1262
        %v1691 = vunpack.c.h.b16 %v1262
        %v1692 = vunpack.c.l.b16 %v1263
        %v1693 = vunpack.c.h.b16 %v1263
        %v1694 = vunpack.c.l.b16 %v1264
        %v1695 = vunpack.c.h.b16 %v1264
        %v1696 = vunpack.c.l.b16 %v1265
        %v1697 = vunpack.c.h.b16 %v1265
        %v1698 = vpack.c.b16 %v1412, %v1410
        %v1699 = vpack.c.b16 %v1413, %v1411
        %v1700 = vpack.c.b16 %v1416, %v1414
        %v1701 = vpack.c.b16 %v1417, %v1415
        %v1702 = vpack.c.b16 %v1420, %v1418
        %v1703 = vpack.c.b16 %v1421, %v1419
        %v1704 = vpack.c.b16 %v1424, %v1422
        %v1705 = vpack.c.b16 %v1425, %v1423
        %v1706 = vpack.c.b16 %v1428, %v1426
        %v1707 = vpack.c.b16 %v1429, %v1427
        %v1708 = vpack.c.b16 %v1432, %v1430
        %v1709 = vpack.c.b16 %v1433, %v1431
        %v1710 = vpack.c.b16 %v1436, %v1434
        %v1711 = vpack.c.b16 %v1437, %v1435
        %v1712 = vpack.c.b16 %v1440, %v1438
        %v1713 = vpack.c.b16 %v1441, %v1439
        %v1714 = vpack.c.b16 %v1444, %v1442
        %v1715 = vpack.c.b16 %v1445, %v1443
        %v1716 = vpack.c.b16 %v1448, %v1446
        %v1717 = vpack.c.b16 %v1449, %v1447
        %v1718 = vpack.c.b16 %v1452, %v1450
        %v1719 = vpack.c.b16 %v1453, %v1451
        %v1720 = vpack.c.b16 %v1456, %v1454
        %v1721 = vpack.c.b16 %v1457, %v1455
        %v1722 = vpack.c.b16 %v1460, %v1458
        %v1723 = vpack.c.b16 %v1461, %v1459
        %v1724 = vpack.c.b16 %v1464, %v1462
        %v1725 = vpack.c.b16 %v1465, %v1463
        %v1726 = vpack.c.b16 %v1468, %v1466
        %v1727 = vpack.c.b16 %v1469, %v1467
        %v1728 = vpack.c.b16 %v1472, %v1470
        %v1729 = vpack.c.b16 %v1473, %v1471
        %v1730 = vpack.c.b16 %v1476, %v1474
        %v1731 = vpack.c.b16 %v1477, %v1475
        %v1732 = vpack.c.b16 %v1480, %v1478
        %v1733 = vpack.c.b16 %v1481, %v1479
        %v1734 = vpack.c.b16 %v1484, %v1482
        %v1735 = vpack.c.b16 %v1485, %v1483
        %v1736 = vpack.c.b16 %v1488, %v1486
        %v1737 = vpack.c.b16 %v1489, %v1487
        %v1738 = vpack.c.b16 %v1492, %v1490
        %v1739 = vpack.c.b16 %v1493, %v1491
        %v1740 = vpack.c.b16 %v1496, %v1494
        %v1741 = vpack.c.b16 %v1497, %v1495
        %v1742 = vpack.c.b16 %v1500, %v1498
        %v1743 = vpack.c.b16 %v1501, %v1499
        %v1744 = vpack.c.b16 %v1504, %v1502
        %v1745 = vpack.c.b16 %v1505, %v1503
        %v1746 = vpack.c.b16 %v1508, %v1506
        %v1747 = vpack.c.b16 %v1509, %v1507
        %v1748 = vpack.c.b16 %v1512, %v1510
        %v1749 = vpack.c.b16 %v1513, %v1511
        %v1750 = vpack.c.b16 %v1516, %v1514
        %v1751 = vpack.c.b16 %v1517, %v1515
        %v1752 = vpack.c.b16 %v1520, %v1518
        %v1753 = vpack.c.b16 %v1521, %v1519
        %v1754 = vpack.c.b16 %v1524, %v1522
        %v1755 = vpack.c.b16 %v1525, %v1523
        %v1756 = vpack.c.b16 %v1528, %v1526
        %v1757 = vpack.c.b16 %v1529, %v1527
        %v1758 = vpack.c.b16 %v1532, %v1530
        %v1759 = vpack.c.b16 %v1533, %v1531
        %v1760 = vpack.c.b16 %v1536, %v1534
        %v1761 = vpack.c.b16 %v1537, %v1535
        %v1762 = vpack.c.b16 %v1540, %v1538
        %v1763 = vpack.c.b16 %v1541, %v1539
        %v1764 = vpack.c.b16 %v1544, %v1542
        %v1765 = vpack.c.b16 %v1545, %v1543
        %v1766 = vpack.c.b16 %v1548, %v1546
        %v1767 = vpack.c.b16 %v1549, %v1547
        %v1768 = vpack.c.b16 %v1552, %v1550
        %v1769 = vpack.c.b16 %v1553, %v1551
        %v1770 = vpack.c.b16 %v1556, %v1554
        %v1771 = vpack.c.b16 %v1557, %v1555
        %v1772 = vpack.c.b16 %v1560, %v1558
        %v1773 = vpack.c.b16 %v1561, %v1559
        %v1774 = vpack.c.b16 %v1564, %v1562
        %v1775 = vpack.c.b16 %v1565, %v1563
        %v1776 = vpack.c.b16 %v1568, %v1566
        %v1777 = vpack.c.b16 %v1569, %v1567
        %v1778 = vpack.c.b16 %v1572, %v1570
        %v1779 = vpack.c.b16 %v1573, %v1571
        %v1780 = vpack.c.b16 %v1576, %v1574
        %v1781 = vpack.c.b16 %v1577, %v1575
        %v1782 = vpack.c.b16 %v1580, %v1578
        %v1783 = vpack.c.b16 %v1581, %v1579
        %v1784 = vpack.c.b16 %v1584, %v1582
        %v1785 = vpack.c.b16 %v1585, %v1583
        %v1786 = vpack.c.b16 %v1588, %v1586
        %v1787 = vpack.c.b16 %v1589, %v1587
        %v1788 = vpack.c.b16 %v1592, %v1590
        %v1789 = vpack.c.b16 %v1593, %v1591
        %v1790 = vpack.c.b16 %v1596, %v1594
        %v1791 = vpack.c.b16 %v1597, %v1595
        %v1792 = vpack.c.b16 %v1600, %v1598
        %v1793 = vpack.c.b16 %v1601, %v1599
        %v1794 = vpack.c.b16 %v1604, %v1602
        %v1795 = vpack.c.b16 %v1605, %v1603
        %v1796 = vpack.c.b16 %v1608, %v1606
        %v1797 = vpack.c.b16 %v1609, %v1607
        %v1798 = vpack.c.b16 %v1612, %v1610
        %v1799 = vpack.c.b16 %v1613, %v1611
        %v1800 = vpack.c.b16 %v1616, %v1614
        %v1801 = vpack.c.b16 %v1617, %v1615
        %v1802 = vpack.c.b16 %v1620, %v1618
        %v1803 = vpack.c.b16 %v1621, %v1619
        %v1804 = vpack.c.b16 %v1624, %v1622
        %v1805 = vpack.c.b16 %v1625, %v1623
        %v1806 = vpack.c.b16 %v1628, %v1626
        %v1807 = vpack.c.b16 %v1629, %v1627
        %v1808 = vpack.c.b16 %v1632, %v1630
        %v1809 = vpack.c.b16 %v1633, %v1631
        %v1810 = vpack.c.b16 %v1636, %v1634
        %v1811 = vpack.c.b16 %v1637, %v1635
        %v1812 = vpack.c.b16 %v1640, %v1638
        %v1813 = vpack.c.b16 %v1641, %v1639
        %v1814 = vpack.c.b16 %v1644, %v1642
        %v1815 = vpack.c.b16 %v1645, %v1643
        %v1816 = vpack.c.b16 %v1648, %v1646
        %v1817 = vpack.c.b16 %v1649, %v1647
        %v1818 = vpack.c.b16 %v1652, %v1650
        %v1819 = vpack.c.b16 %v1653, %v1651
        %v1820 = vpack.c.b16 %v1656, %v1654
        %v1821 = vpack.c.b16 %v1657, %v1655
        %v1822 = vpack.c.b16 %v1660, %v1658
        %v1823 = vpack.c.b16 %v1661, %v1659
        %v1824 = vpack.c.b16 %v1664, %v1662
        %v1825 = vpack.c.b16 %v1665, %v1663
        %v1826 = vpack.c.b16 %v1668, %v1666
        %v1827 = vpack.c.b16 %v1669, %v1667
        %v1828 = vpack.c.b16 %v1672, %v1670
        %v1829 = vpack.c.b16 %v1673, %v1671
        %v1830 = vpack.c.b16 %v1676, %v1674
        %v1831 = vpack.c.b16 %v1677, %v1675
        %v1832 = vpack.c.b16 %v1680, %v1678
        %v1833 = vpack.c.b16 %v1681, %v1679
        %v1834 = vpack.c.b16 %v1684, %v1682
        %v1835 = vpack.c.b16 %v1685, %v1683
        %v1836 = vpack.c.b16 %v1688, %v1686
        %v1837 = vpack.c.b16 %v1689, %v1687
        %v1838 = vpack.c.b16 %v1692, %v1690
        %v1839 = vpack.c.b16 %v1693, %v1691
        %v1840 = vpack.c.b16 %v1696, %v1694
        %v1841 = vpack.c.b16 %v1697, %v1695
        %1986 = vmatprep.subr.bf16.mxu0 %v1713
        %1987 = vmatpush1.bf16.msra.mxu0 %v1712
        %1988 = vmatprep.subr.bf16.mxu0 %v1711
        %1989 = vmatpush1.bf16.msra.mxu0 %v1710
        %1990 = vmatprep.subr.bf16.mxu0 %v1709
        %1991 = vmatpush1.bf16.msra.mxu0 %v1708
        %1992 = vmatprep.subr.bf16.mxu0 %v1707
        %1993 = vmatpush1.bf16.msra.mxu0 %v1706
        %1994 = vmatprep.subr.bf16.mxu0 %v1705
        %1995 = vmatpush1.bf16.msra.mxu0 %v1704
        %1996 = vmatprep.subr.bf16.mxu0 %v1703
        %1997 = vmatpush1.bf16.msra.mxu0 %v1702
        %1998 = vmatprep.subr.bf16.mxu0 %v1701
        %1999 = vmatpush1.bf16.msra.mxu0 %v1700
        %2000 = vmatprep.subr.bf16.mxu0 %v1699
        %2001 = vmatpush1.bf16.msra.mxu0 %v1698
        %2002 = vmatprep.subr.bf16.mxu0 %v1729
        %2003 = vmatpush2.bf16.msra.mxu0 %v1728
        %2004 = vmatprep.subr.bf16.mxu0 %v1727
        %2005 = vmatpush2.bf16.msra.mxu0 %v1726
        %2006 = vmatprep.subr.bf16.mxu0 %v1725
        %2007 = vmatpush2.bf16.msra.mxu0 %v1724
        %2008 = vmatprep.subr.bf16.mxu0 %v1723
        %2009 = vmatpush2.bf16.msra.mxu0 %v1722
        %2010 = vmatprep.subr.bf16.mxu0 %v1721
        %2011 = vmatpush2.bf16.msra.mxu0 %v1720
        %2012 = vmatprep.subr.bf16.mxu0 %v1719
        %2013 = vmatpush2.bf16.msra.mxu0 %v1718
        %2014 = vmatprep.subr.bf16.mxu0 %v1717
        %2015 = vmatpush2.bf16.msra.mxu0 %v1716
        %2016 = vmatprep.subr.bf16.mxu0 %v1715
        %2017 = vmatpush2.bf16.msra.mxu0 %v1714
        %2018 = vmatprep.mubr.bf16.mxu0 %v986
        %2019 = vmatmul.mubr.bf16.gmra.mxu0 %v970
        %v2020 = vpop.f32.mrf.mxu0
        %v2021 = vadd.f32 0.0, %v2020
        %v2022 = vpop.f32.mrf.mxu0
        %v2023 = vadd.f32 0.0, %v2022
        %v2024 = vpop.f32.mrf.mxu0
        %v2025 = vadd.f32 0.0, %v2024
        %v2026 = vpop.f32.mrf.mxu0
        %v2027 = vadd.f32 0.0, %v2026
        %2028 = vmatprep.mubr.bf16.mxu0 %v987
        %2029 = vmatmul.mubr.bf16.gmra.mxu0 %v971
        %v2030 = vpop.f32.mrf.mxu0
        %v2031 = vadd.f32 0.0, %v2030
        %v2032 = vpop.f32.mrf.mxu0
        %v2033 = vadd.f32 0.0, %v2032
        %v2034 = vpop.f32.mrf.mxu0
        %v2035 = vadd.f32 0.0, %v2034
        %v2036 = vpop.f32.mrf.mxu0
        %v2037 = vadd.f32 0.0, %v2036
        %2038 = vmatprep.mubr.bf16.mxu0 %v988
        %2039 = vmatmul.mubr.bf16.gmra.mxu0 %v972
        %v2040 = vpop.f32.mrf.mxu0
        %v2041 = vadd.f32 0.0, %v2040
        %v2042 = vpop.f32.mrf.mxu0
        %v2043 = vadd.f32 0.0, %v2042
        %v2044 = vpop.f32.mrf.mxu0
        %v2045 = vadd.f32 0.0, %v2044
        %v2046 = vpop.f32.mrf.mxu0
        %v2047 = vadd.f32 0.0, %v2046
        %2048 = vmatprep.mubr.bf16.mxu0 %v989
        %2049 = vmatmul.mubr.bf16.gmra.mxu0 %v973
        %v2050 = vpop.f32.mrf.mxu0
        %v2051 = vadd.f32 0.0, %v2050
        %v2052 = vpop.f32.mrf.mxu0
        %v2053 = vadd.f32 0.0, %v2052
        %v2054 = vpop.f32.mrf.mxu0
        %v2055 = vadd.f32 0.0, %v2054
        %v2056 = vpop.f32.mrf.mxu0
        %v2057 = vadd.f32 0.0, %v2056
        %2058 = vdwg.mxu0
        %2059 = vmatprep.subr.bf16.mxu0 %v1745
        %2060 = vmatpush1.bf16.msra.mxu0 %v1744
        %2061 = vmatprep.subr.bf16.mxu0 %v1743
        %2062 = vmatpush1.bf16.msra.mxu0 %v1742
        %2063 = vmatprep.subr.bf16.mxu0 %v1741
        %2064 = vmatpush1.bf16.msra.mxu0 %v1740
        %2065 = vmatprep.subr.bf16.mxu0 %v1739
        %2066 = vmatpush1.bf16.msra.mxu0 %v1738
        %2067 = vmatprep.subr.bf16.mxu0 %v1737
        %2068 = vmatpush1.bf16.msra.mxu0 %v1736
        %2069 = vmatprep.subr.bf16.mxu0 %v1735
        %2070 = vmatpush1.bf16.msra.mxu0 %v1734
        %2071 = vmatprep.subr.bf16.mxu0 %v1733
        %2072 = vmatpush1.bf16.msra.mxu0 %v1732
        %2073 = vmatprep.subr.bf16.mxu0 %v1731
        %2074 = vmatpush1.bf16.msra.mxu0 %v1730
        %2075 = vmatprep.subr.bf16.mxu0 %v1761
        %2076 = vmatpush2.bf16.msra.mxu0 %v1760
        %2077 = vmatprep.subr.bf16.mxu0 %v1759
        %2078 = vmatpush2.bf16.msra.mxu0 %v1758
        %2079 = vmatprep.subr.bf16.mxu0 %v1757
        %2080 = vmatpush2.bf16.msra.mxu0 %v1756
        %2081 = vmatprep.subr.bf16.mxu0 %v1755
        %2082 = vmatpush2.bf16.msra.mxu0 %v1754
        %2083 = vmatprep.subr.bf16.mxu0 %v1753
        %2084 = vmatpush2.bf16.msra.mxu0 %v1752
        %2085 = vmatprep.subr.bf16.mxu0 %v1751
        %2086 = vmatpush2.bf16.msra.mxu0 %v1750
        %2087 = vmatprep.subr.bf16.mxu0 %v1749
        %2088 = vmatpush2.bf16.msra.mxu0 %v1748
        %2089 = vmatprep.subr.bf16.mxu0 %v1747
        %2090 = vmatpush2.bf16.msra.mxu0 %v1746
        %2091 = vmatprep.mubr.bf16.mxu0 %v1026
        %2092 = vmatmul.mubr.bf16.gmra.mxu0 %v1002
        %v2093 = vpop.f32.mrf.mxu0
        %v2094 = vadd.f32 %v2021, %v2093
        %v2095 = vpop.f32.mrf.mxu0
        %v2096 = vadd.f32 %v2023, %v2095
        %v2097 = vpop.f32.mrf.mxu0
        %v2098 = vadd.f32 %v2025, %v2097
        %v2099 = vpop.f32.mrf.mxu0
        %v2100 = vadd.f32 %v2027, %v2099
        %2101 = vmatprep.mubr.bf16.mxu0 %v1027
        %2102 = vmatmul.mubr.bf16.gmra.mxu0 %v1003
        %v2103 = vpop.f32.mrf.mxu0
        %v2104 = vadd.f32 %v2031, %v2103
        %v2105 = vpop.f32.mrf.mxu0
        %v2106 = vadd.f32 %v2033, %v2105
        %v2107 = vpop.f32.mrf.mxu0
        %v2108 = vadd.f32 %v2035, %v2107
        %v2109 = vpop.f32.mrf.mxu0
        %v2110 = vadd.f32 %v2037, %v2109
        %2111 = vmatprep.mubr.bf16.mxu0 %v1028
        %2112 = vmatmul.mubr.bf16.gmra.mxu0 %v1004
        %v2113 = vpop.f32.mrf.mxu0
        %v2114 = vadd.f32 %v2041, %v2113
        %v2115 = vpop.f32.mrf.mxu0
        %v2116 = vadd.f32 %v2043, %v2115
        %v2117 = vpop.f32.mrf.mxu0
        %v2118 = vadd.f32 %v2045, %v2117
        %v2119 = vpop.f32.mrf.mxu0
        %v2120 = vadd.f32 %v2047, %v2119
        %2121 = vmatprep.mubr.bf16.mxu0 %v1029
        %2122 = vmatmul.mubr.bf16.gmra.mxu0 %v1005
        %v2123 = vpop.f32.mrf.mxu0
        %v2124 = vadd.f32 %v2051, %v2123
        %v2125 = vpop.f32.mrf.mxu0
        %v2126 = vadd.f32 %v2053, %v2125
        %v2127 = vpop.f32.mrf.mxu0
        %v2128 = vadd.f32 %v2055, %v2127
        %v2129 = vpop.f32.mrf.mxu0
        %v2130 = vadd.f32 %v2057, %v2129
        %2131 = vdwg.mxu0
        %2132 = vmatprep.subr.bf16.mxu0 %v1777
        %2133 = vmatpush1.bf16.msra.mxu0 %v1776
        %2134 = vmatprep.subr.bf16.mxu0 %v1775
        %2135 = vmatpush1.bf16.msra.mxu0 %v1774
        %2136 = vmatprep.subr.bf16.mxu0 %v1773
        %2137 = vmatpush1.bf16.msra.mxu0 %v1772
        %2138 = vmatprep.subr.bf16.mxu0 %v1771
        %2139 = vmatpush1.bf16.msra.mxu0 %v1770
        %2140 = vmatprep.subr.bf16.mxu0 %v1769
        %2141 = vmatpush1.bf16.msra.mxu0 %v1768
        %2142 = vmatprep.subr.bf16.mxu0 %v1767
        %2143 = vmatpush1.bf16.msra.mxu0 %v1766
        %2144 = vmatprep.subr.bf16.mxu0 %v1765
        %2145 = vmatpush1.bf16.msra.mxu0 %v1764
        %2146 = vmatprep.subr.bf16.mxu0 %v1763
        %2147 = vmatpush1.bf16.msra.mxu0 %v1762
        %2148 = vmatprep.subr.bf16.mxu0 %v1793
        %2149 = vmatpush2.bf16.msra.mxu0 %v1792
        %2150 = vmatprep.subr.bf16.mxu0 %v1791
        %2151 = vmatpush2.bf16.msra.mxu0 %v1790
        %2152 = vmatprep.subr.bf16.mxu0 %v1789
        %2153 = vmatpush2.bf16.msra.mxu0 %v1788
        %2154 = vmatprep.subr.bf16.mxu0 %v1787
        %2155 = vmatpush2.bf16.msra.mxu0 %v1786
        %2156 = vmatprep.subr.bf16.mxu0 %v1785
        %2157 = vmatpush2.bf16.msra.mxu0 %v1784
        %2158 = vmatprep.subr.bf16.mxu0 %v1783
        %2159 = vmatpush2.bf16.msra.mxu0 %v1782
        %2160 = vmatprep.subr.bf16.mxu0 %v1781
        %2161 = vmatpush2.bf16.msra.mxu0 %v1780
        %2162 = vmatprep.subr.bf16.mxu0 %v1779
        %2163 = vmatpush2.bf16.msra.mxu0 %v1778
        %2164 = vmatprep.mubr.bf16.mxu0 %v1058
        %2165 = vmatmul.mubr.bf16.gmra.mxu0 %v1042
        %v2166 = vpop.f32.mrf.mxu0
        %v2167 = vadd.f32 %v2094, %v2166
        %v2168 = vpop.f32.mrf.mxu0
        %v2169 = vadd.f32 %v2096, %v2168
        %v2170 = vpop.f32.mrf.mxu0
        %v2171 = vadd.f32 %v2098, %v2170
        %v2172 = vpop.f32.mrf.mxu0
        %v2173 = vadd.f32 %v2100, %v2172
        %2174 = vmatprep.mubr.bf16.mxu0 %v1059
        %2175 = vmatmul.mubr.bf16.gmra.mxu0 %v1043
        %v2176 = vpop.f32.mrf.mxu0
        %v2177 = vadd.f32 %v2104, %v2176
        %v2178 = vpop.f32.mrf.mxu0
        %v2179 = vadd.f32 %v2106, %v2178
        %v2180 = vpop.f32.mrf.mxu0
        %v2181 = vadd.f32 %v2108, %v2180
        %v2182 = vpop.f32.mrf.mxu0
        %v2183 = vadd.f32 %v2110, %v2182
        %2184 = vmatprep.mubr.bf16.mxu0 %v1060
        %2185 = vmatmul.mubr.bf16.gmra.mxu0 %v1044
        %v2186 = vpop.f32.mrf.mxu0
        %v2187 = vadd.f32 %v2114, %v2186
        %v2188 = vpop.f32.mrf.mxu0
        %v2189 = vadd.f32 %v2116, %v2188
        %v2190 = vpop.f32.mrf.mxu0
        %v2191 = vadd.f32 %v2118, %v2190
        %v2192 = vpop.f32.mrf.mxu0
        %v2193 = vadd.f32 %v2120, %v2192
        %2194 = vmatprep.mubr.bf16.mxu0 %v1061
        %2195 = vmatmul.mubr.bf16.gmra.mxu0 %v1045
        %v2196 = vpop.f32.mrf.mxu0
        %v2197 = vadd.f32 %v2124, %v2196
        %v2198 = vpop.f32.mrf.mxu0
        %v2199 = vadd.f32 %v2126, %v2198
        %v2200 = vpop.f32.mrf.mxu0
        %v2201 = vadd.f32 %v2128, %v2200
        %v2202 = vpop.f32.mrf.mxu0
        %v2203 = vadd.f32 %v2130, %v2202
        %2204 = vdwg.mxu0
        %2205 = vmatprep.subr.bf16.mxu0 %v1809
        %2206 = vmatpush1.bf16.msra.mxu0 %v1808
        %2207 = vmatprep.subr.bf16.mxu0 %v1807
        %2208 = vmatpush1.bf16.msra.mxu0 %v1806
        %2209 = vmatprep.subr.bf16.mxu0 %v1805
        %2210 = vmatpush1.bf16.msra.mxu0 %v1804
        %2211 = vmatprep.subr.bf16.mxu0 %v1803
        %2212 = vmatpush1.bf16.msra.mxu0 %v1802
        %2213 = vmatprep.subr.bf16.mxu0 %v1801
        %2214 = vmatpush1.bf16.msra.mxu0 %v1800
        %2215 = vmatprep.subr.bf16.mxu0 %v1799
        %2216 = vmatpush1.bf16.msra.mxu0 %v1798
        %2217 = vmatprep.subr.bf16.mxu0 %v1797
        %2218 = vmatpush1.bf16.msra.mxu0 %v1796
        %2219 = vmatprep.subr.bf16.mxu0 %v1795
        %2220 = vmatpush1.bf16.msra.mxu0 %v1794
        %2221 = vmatprep.subr.bf16.mxu0 %v1825
        %2222 = vmatpush2.bf16.msra.mxu0 %v1824
        %2223 = vmatprep.subr.bf16.mxu0 %v1823
        %2224 = vmatpush2.bf16.msra.mxu0 %v1822
        %2225 = vmatprep.subr.bf16.mxu0 %v1821
        %2226 = vmatpush2.bf16.msra.mxu0 %v1820
        %2227 = vmatprep.subr.bf16.mxu0 %v1819
        %2228 = vmatpush2.bf16.msra.mxu0 %v1818
        %2229 = vmatprep.subr.bf16.mxu0 %v1817
        %2230 = vmatpush2.bf16.msra.mxu0 %v1816
        %2231 = vmatprep.subr.bf16.mxu0 %v1815
        %2232 = vmatpush2.bf16.msra.mxu0 %v1814
        %2233 = vmatprep.subr.bf16.mxu0 %v1813
        %2234 = vmatpush2.bf16.msra.mxu0 %v1812
        %2235 = vmatprep.subr.bf16.mxu0 %v1811
        %2236 = vmatpush2.bf16.msra.mxu0 %v1810
        %2237 = vmatprep.mubr.bf16.mxu0 %v1098
        %2238 = vmatmul.mubr.bf16.gmra.mxu0 %v1082
        %v2239 = vpop.f32.mrf.mxu0
        %v2240 = vadd.f32 %v2167, %v2239
        %v2241 = vpop.f32.mrf.mxu0
        %v2242 = vadd.f32 %v2169, %v2241
        %v2243 = vpop.f32.mrf.mxu0
        %v2244 = vadd.f32 %v2171, %v2243
        %v2245 = vpop.f32.mrf.mxu0
        %v2246 = vadd.f32 %v2173, %v2245
        %2247 = vmatprep.mubr.bf16.mxu0 %v1099
        %2248 = vmatmul.mubr.bf16.gmra.mxu0 %v1083
        %v2249 = vpop.f32.mrf.mxu0
        %v2250 = vadd.f32 %v2177, %v2249
        %v2251 = vpop.f32.mrf.mxu0
        %v2252 = vadd.f32 %v2179, %v2251
        %v2253 = vpop.f32.mrf.mxu0
        %v2254 = vadd.f32 %v2181, %v2253
        %v2255 = vpop.f32.mrf.mxu0
        %v2256 = vadd.f32 %v2183, %v2255
        %2257 = vmatprep.mubr.bf16.mxu0 %v1100
        %2258 = vmatmul.mubr.bf16.gmra.mxu0 %v1084
        %v2259 = vpop.f32.mrf.mxu0
        %v2260 = vadd.f32 %v2187, %v2259
        %v2261 = vpop.f32.mrf.mxu0
        %v2262 = vadd.f32 %v2189, %v2261
        %v2263 = vpop.f32.mrf.mxu0
        %v2264 = vadd.f32 %v2191, %v2263
        %v2265 = vpop.f32.mrf.mxu0
        %v2266 = vadd.f32 %v2193, %v2265
        %2267 = vmatprep.mubr.bf16.mxu0 %v1101
        %2268 = vmatmul.mubr.bf16.gmra.mxu0 %v1085
        %v2269 = vpop.f32.mrf.mxu0
        %v2270 = vadd.f32 %v2197, %v2269
        %v2271 = vpop.f32.mrf.mxu0
        %v2272 = vadd.f32 %v2199, %v2271
        %v2273 = vpop.f32.mrf.mxu0
        %v2274 = vadd.f32 %v2201, %v2273
        %v2275 = vpop.f32.mrf.mxu0
        %v2276 = vadd.f32 %v2203, %v2275
        %2277 = vdwg.mxu0
        %2278 = vmatprep.subr.bf16.mxu0 %v1841
        %2279 = vmatpush1.bf16.msra.mxu0 %v1840
        %2280 = vmatprep.subr.bf16.mxu0 %v1839
        %2281 = vmatpush1.bf16.msra.mxu0 %v1838
        %2282 = vmatprep.subr.bf16.mxu0 %v1837
        %2283 = vmatpush1.bf16.msra.mxu0 %v1836
        %2284 = vmatprep.subr.bf16.mxu0 %v1835
        %2285 = vmatpush1.bf16.msra.mxu0 %v1834
        %2286 = vmatprep.subr.bf16.mxu0 %v1833
        %2287 = vmatpush1.bf16.msra.mxu0 %v1832
        %2288 = vmatprep.subr.bf16.mxu0 %v1831
        %2289 = vmatpush1.bf16.msra.mxu0 %v1830
        %2290 = vmatprep.subr.bf16.mxu0 %v1829
        %2291 = vmatpush1.bf16.msra.mxu0 %v1828
        %2292 = vmatprep.subr.bf16.mxu0 %v1827
        %2293 = vmatpush1.bf16.msra.mxu0 %v1826
        %2294 = vmatprep.subr.bf16.mxu0 0
        %2295 = vmatpush2.bf16.msra.mxu0 0
        %2296 = vmatprep.subr.bf16.mxu0 0
        %2297 = vmatpush2.bf16.msra.mxu0 0
        %2298 = vmatprep.subr.bf16.mxu0 0
        %2299 = vmatpush2.bf16.msra.mxu0 0
        %2300 = vmatprep.subr.bf16.mxu0 0
        %2301 = vmatpush2.bf16.msra.mxu0 0
        %2302 = vmatprep.subr.bf16.mxu0 0
        %2303 = vmatpush2.bf16.msra.mxu0 0
        %2304 = vmatprep.subr.bf16.mxu0 0
        %2305 = vmatpush2.bf16.msra.mxu0 0
        %2306 = vmatprep.subr.bf16.mxu0 0
        %2307 = vmatpush2.bf16.msra.mxu0 0
        %2308 = vmatprep.subr.bf16.mxu0 0
        %2309 = vmatpush2.bf16.msra.mxu0 0
        %2310 = vmatprep.mubr.bf16.mxu0 0
        %2311 = vmatmul.mubr.bf16.gmra.mxu0 %v1114
        %v2312 = vpop.f32.mrf.mxu0
        %v2313 = vadd.f32 %v2240, %v2312
        %v2314 = vpop.f32.mrf.mxu0
        %v2315 = vadd.f32 %v2242, %v2314
        %v2316 = vpop.f32.mrf.mxu0
        %v2317 = vadd.f32 %v2244, %v2316
        %v2318 = vpop.f32.mrf.mxu0
        %v2319 = vadd.f32 %v2246, %v2318
        %2320 = vmatprep.mubr.bf16.mxu0 0
        %2321 = vmatmul.mubr.bf16.gmra.mxu0 %v1115
        %v2322 = vpop.f32.mrf.mxu0
        %v2323 = vadd.f32 %v2250, %v2322
        %v2324 = vpop.f32.mrf.mxu0
        %v2325 = vadd.f32 %v2252, %v2324
        %v2326 = vpop.f32.mrf.mxu0
        %v2327 = vadd.f32 %v2254, %v2326
        %v2328 = vpop.f32.mrf.mxu0
        %v2329 = vadd.f32 %v2256, %v2328
        %2330 = vmatprep.mubr.bf16.mxu0 0
        %2331 = vmatmul.mubr.bf16.gmra.mxu0 %v1116
        %v2332 = vpop.f32.mrf.mxu0
        %v2333 = vadd.f32 %v2260, %v2332
        %v2334 = vpop.f32.mrf.mxu0
        %v2335 = vadd.f32 %v2262, %v2334
        %v2336 = vpop.f32.mrf.mxu0
        %v2337 = vadd.f32 %v2264, %v2336
        %v2338 = vpop.f32.mrf.mxu0
        %v2339 = vadd.f32 %v2266, %v2338
        %2340 = vmatprep.mubr.bf16.mxu0 0
        %2341 = vmatmul.mubr.bf16.gmra.mxu0 %v1117
        %v2342 = vpop.f32.mrf.mxu0
        %v2343 = vadd.f32 %v2270, %v2342
        %v2344 = vpop.f32.mrf.mxu0
        %v2345 = vadd.f32 %v2272, %v2344
        %v2346 = vpop.f32.mrf.mxu0
        %v2347 = vadd.f32 %v2274, %v2346
        %v2348 = vpop.f32.mrf.mxu0
        %v2349 = vadd.f32 %v2276, %v2348
        %2350 = vdwg.mxu0
        %v2351 = vadd.f32 %v2313, %v2317
        %v2352 = vadd.f32 %v2351, %v2323
        %v2353 = vadd.f32 %v2352, %v2327
        %v2354 = vadd.f32 %v2353, %v2333
        %v2355 = vadd.f32 %v2354, %v2337
        %v2356 = vadd.f32 %v2355, %v2343
        %v2357 = vadd.f32 %v2356, %v2347
        %v2358 = vrot.slane %v2357, 4
        %v2359 = vadd.f32 %v2357, %v2358
        %v2360 = vrot.slane %v2359, 2
        %v2361 = vadd.f32 %v2359, %v2360
        %v2362 = vrot.slane %v2361, 1
        %v2363 = vadd.f32 %v2361, %v2362
        %v2364 = vadd.f32 %v2315, %v2319
        %v2365 = vadd.f32 %v2364, %v2325
        %v2366 = vadd.f32 %v2365, %v2329
        %v2367 = vadd.f32 %v2366, %v2335
        %v2368 = vadd.f32 %v2367, %v2339
        %v2369 = vadd.f32 %v2368, %v2345
        %v2370 = vadd.f32 %v2369, %v2349
        %v2371 = vrot.slane %v2370, 4
        %v2372 = vadd.f32 %v2370, %v2371
        %v2373 = vrot.slane %v2372, 2
        %v2374 = vadd.f32 %v2372, %v2373
        %v2375 = vrot.slane %v2374, 1
        %v2376 = vadd.f32 %v2374, %v2375
        %2378 = vrot.lane.b32.xlu0 %v2363, 64
        %v2379 = vpop.permute.xlu0 %2378
        %v2381 = vadd.f32 %v2363, %v2379
        %v2382 = vadd.f32 %v2381, %v2376
        %2384 = vrot.lane.b32.xlu0 %v2376, 64
        %v2385 = vpop.permute.xlu0 %2384
        %v2387 = vadd.f32 %v2382, %v2385
        %v2388 = vmul.f32 %v2387, 0.00390625
        %2390 = vrot.lane.b32.xlu0 %v2388, 64
        %v2391 = vpop.permute.xlu0 %2390
        %vm2393 = vcmask 523264
        %v2394 = vsel %vm2393, %v2388, %v2391
        %v2395 = vlaneseq
        %v2396 = vshrl.u32 %v2395, 7
        %v2397 = vsub.s32 0, %v2396
        %v2398 = vrot.slane %v2394, %v2397
        %v2399 = vsub.f32 %v2313, %v2398
        %v2400 = vsub.f32 %v2315, %v2398
        %v2401 = vsub.f32 %v2317, %v2398
        %v2402 = vsub.f32 %v2319, %v2398
        %v2403 = vsub.f32 %v2323, %v2398
        %v2404 = vsub.f32 %v2325, %v2398
        %v2405 = vsub.f32 %v2327, %v2398
        %v2406 = vsub.f32 %v2329, %v2398
        %v2407 = vsub.f32 %v2333, %v2398
        %v2408 = vsub.f32 %v2335, %v2398
        %v2409 = vsub.f32 %v2337, %v2398
        %v2410 = vsub.f32 %v2339, %v2398
        %v2411 = vsub.f32 %v2343, %v2398
        %v2412 = vsub.f32 %v2345, %v2398
        %v2413 = vsub.f32 %v2347, %v2398
        %v2414 = vsub.f32 %v2349, %v2398
        %v2415 = vmul.f32 %v2399, %v2399
        %v2416 = vmul.f32 %v2400, %v2400
        %v2417 = vmul.f32 %v2401, %v2401
        %v2418 = vmul.f32 %v2402, %v2402
        %v2419 = vmul.f32 %v2403, %v2403
        %v2420 = vmul.f32 %v2404, %v2404
        %v2421 = vmul.f32 %v2405, %v2405
        %v2422 = vmul.f32 %v2406, %v2406
        %v2423 = vmul.f32 %v2407, %v2407
        %v2424 = vmul.f32 %v2408, %v2408
        %v2425 = vmul.f32 %v2409, %v2409
        %v2426 = vmul.f32 %v2410, %v2410
        %v2427 = vmul.f32 %v2411, %v2411
        %v2428 = vmul.f32 %v2412, %v2412
        %v2429 = vmul.f32 %v2413, %v2413
        %v2430 = vmul.f32 %v2414, %v2414
        %v2431 = vadd.f32 %v2415, %v2417
        %v2432 = vadd.f32 %v2431, %v2419
        %v2433 = vadd.f32 %v2432, %v2421
        %v2434 = vadd.f32 %v2433, %v2423
        %v2435 = vadd.f32 %v2434, %v2425
        %v2436 = vadd.f32 %v2435, %v2427
        %v2437 = vadd.f32 %v2436, %v2429
        %v2438 = vrot.slane %v2437, 4
        %v2439 = vadd.f32 %v2437, %v2438
        %v2440 = vrot.slane %v2439, 2
        %v2441 = vadd.f32 %v2439, %v2440
        %v2442 = vrot.slane %v2441, 1
        %v2443 = vadd.f32 %v2441, %v2442
        %v2444 = vadd.f32 %v2416, %v2418
        %v2445 = vadd.f32 %v2444, %v2420
        %v2446 = vadd.f32 %v2445, %v2422
        %v2447 = vadd.f32 %v2446, %v2424
        %v2448 = vadd.f32 %v2447, %v2426
        %v2449 = vadd.f32 %v2448, %v2428
        %v2450 = vadd.f32 %v2449, %v2430
        %v2451 = vrot.slane %v2450, 4
        %v2452 = vadd.f32 %v2450, %v2451
        %v2453 = vrot.slane %v2452, 2
        %v2454 = vadd.f32 %v2452, %v2453
        %v2455 = vrot.slane %v2454, 1
        %v2456 = vadd.f32 %v2454, %v2455
        %2458 = vrot.lane.b32.xlu0 %v2443, 64
        %v2459 = vpop.permute.xlu0 %2458
        %v2461 = vadd.f32 %v2443, %v2459
        %v2462 = vadd.f32 %v2461, %v2456
        %2464 = vrot.lane.b32.xlu0 %v2456, 64
        %v2465 = vpop.permute.xlu0 %2464
        %v2467 = vadd.f32 %v2462, %v2465
        %v2468 = vmul.f32 %v2467, 0.00390625
        %v2469 = vadd.f32 %v2468, 1e-05
        %v2470 = vrsqrt.pop %v2469
        %v2471 = vld [vmem:[%s2] sm:$0x1]
        %v2472 = vmul.f32 %v2471, %v2470
        %v2474 = vlaneseq
        %v2475 = vshrl.u32 %v2474, 7
        %v2476 = vsub.s32 0, %v2475
        %v2477 = vrot.slane %v2472, %v2476
        %2478 = vrot.lane.b32.xlu0 %v2477, 64
        %v2479 = vpop.permute.xlu0 %2478
        %v2481 = vsel %vm2393, %v2472, %v2479
        %v2482 = vld [vmem:[%s3] sm:$0x1]
        %v2484 = vlaneseq
        %v2485 = vshrl.u32 %v2484, 7
        %v2486 = vsub.s32 0, %v2485
        %v2487 = vrot.slane %v2482, %v2486
        %2488 = vrot.lane.b32.xlu0 %v2487, 64
        %v2489 = vpop.permute.xlu0 %2488
        %v2491 = vsel %vm2393, %v2482, %v2489
        %v2492 = vlaneseq
        %v2493 = vshrl.u32 %v2492, 7
        %v2494 = vsub.s32 0, %v2493
        %v2495 = vrot.slane %v2481, %v2494
        %v2496 = vmul.f32 %v2399, %v2495
        %v2497 = vmul.f32 %v2400, %v2495
        %v2498 = vmul.f32 %v2401, %v2495
        %v2499 = vmul.f32 %v2402, %v2495
        %v2500 = vmul.f32 %v2403, %v2495
        %v2501 = vmul.f32 %v2404, %v2495
        %v2502 = vmul.f32 %v2405, %v2495
        %v2503 = vmul.f32 %v2406, %v2495
        %v2504 = vmul.f32 %v2407, %v2495
        %v2505 = vmul.f32 %v2408, %v2495
        %v2506 = vmul.f32 %v2409, %v2495
        %v2507 = vmul.f32 %v2410, %v2495
        %v2508 = vmul.f32 %v2411, %v2495
        %v2509 = vmul.f32 %v2412, %v2495
        %v2510 = vmul.f32 %v2413, %v2495
        %v2511 = vmul.f32 %v2414, %v2495
        %v2512 = vlaneseq
        %v2513 = vshrl.u32 %v2512, 7
        %v2514 = vsub.s32 0, %v2513
        %v2515 = vrot.slane %v2491, %v2514
        %v2516 = vadd.f32 %v2496, %v2515
        %v2517 = vadd.f32 %v2497, %v2515
        %v2518 = vadd.f32 %v2498, %v2515
        %v2519 = vadd.f32 %v2499, %v2515
        %v2520 = vadd.f32 %v2500, %v2515
        %v2521 = vadd.f32 %v2501, %v2515
        %v2522 = vadd.f32 %v2502, %v2515
        %v2523 = vadd.f32 %v2503, %v2515
        %v2524 = vadd.f32 %v2504, %v2515
        %v2525 = vadd.f32 %v2505, %v2515
        %v2526 = vadd.f32 %v2506, %v2515
        %v2527 = vadd.f32 %v2507, %v2515
        %v2528 = vadd.f32 %v2508, %v2515
        %v2529 = vadd.f32 %v2509, %v2515
        %v2530 = vadd.f32 %v2510, %v2515
        %v2531 = vadd.f32 %v2511, %v2515
        %v2532 = vmul.f32 %v2516, 0.2
        %v2533 = vmul.f32 %v2517, 0.2
        %v2534 = vmul.f32 %v2518, 0.2
        %v2535 = vmul.f32 %v2519, 0.2
        %v2536 = vmul.f32 %v2520, 0.2
        %v2537 = vmul.f32 %v2521, 0.2
        %v2538 = vmul.f32 %v2522, 0.2
        %v2539 = vmul.f32 %v2523, 0.2
        %v2540 = vmul.f32 %v2524, 0.2
        %v2541 = vmul.f32 %v2525, 0.2
        %v2542 = vmul.f32 %v2526, 0.2
        %v2543 = vmul.f32 %v2527, 0.2
        %v2544 = vmul.f32 %v2528, 0.2
        %v2545 = vmul.f32 %v2529, 0.2
        %v2546 = vmul.f32 %v2530, 0.2
        %v2547 = vmul.f32 %v2531, 0.2
        %v2548 = vmax.f32 %v2516, %v2532
        %v2549 = vmax.f32 %v2517, %v2533
        %v2550 = vmax.f32 %v2518, %v2534
        %v2551 = vmax.f32 %v2519, %v2535
        %v2552 = vmax.f32 %v2520, %v2536
        %v2553 = vmax.f32 %v2521, %v2537
        %v2554 = vmax.f32 %v2522, %v2538
        %v2555 = vmax.f32 %v2523, %v2539
        %v2556 = vmax.f32 %v2524, %v2540
        %v2557 = vmax.f32 %v2525, %v2541
        %v2558 = vmax.f32 %v2526, %v2542
        %v2559 = vmax.f32 %v2527, %v2543
        %v2560 = vmax.f32 %v2528, %v2544
        %v2561 = vmax.f32 %v2529, %v2545
        %v2562 = vmax.f32 %v2530, %v2546
        %v2563 = vmax.f32 %v2531, %v2547
        %2564 = vst [vmem:[%s230] sm:$0xff] %v2548
        %2565 = vst [vmem:[%s230 + $0x8] sm:$0xff] %v2549
        %2566 = vst [vmem:[%s230 + $0x10] sm:$0xff] %v2550
        %2567 = vst [vmem:[%s230 + $0x18] sm:$0xff] %v2551
        %2568 = vst [vmem:[%s230 + $0x20] sm:$0xff] %v2552
        %2569 = vst [vmem:[%s230 + $0x28] sm:$0xff] %v2553
        %2570 = vst [vmem:[%s230 + $0x30] sm:$0xff] %v2554
        %2571 = vst [vmem:[%s230 + $0x38] sm:$0xff] %v2555
        %2572 = vst [vmem:[%s230 + $0x40] sm:$0xff] %v2556
        %2573 = vst [vmem:[%s230 + $0x48] sm:$0xff] %v2557
        %2574 = vst [vmem:[%s230 + $0x50] sm:$0xff] %v2558
        %2575 = vst [vmem:[%s230 + $0x58] sm:$0xff] %v2559
        %2576 = vst [vmem:[%s230 + $0x60] sm:$0xff] %v2560
        %2577 = vst [vmem:[%s230 + $0x68] sm:$0xff] %v2561
        %2578 = vst [vmem:[%s230 + $0x70] sm:$0xff] %v2562
        %2579 = vst [vmem:[%s230 + $0x78] sm:$0xff] %v2563
        %s2580 = sand.u32 %s119, 1
        %s2581 = scalar_lea.sflag [#allocation5], %s2580
        %s2582 = sand.u32 %s119, 1
        %s2583 = smul.addr %s2582, 128
        %s2584 = scalar_lea.vmem [#allocation8], %s2583
        // Predicated region
        $region45: #{tpu_custom_call.1} parent=35 // pred_check
          %p2585 = pneg %p129
        $region46: #{tpu_custom_call.1} parent=35 // pred_check_branch
          %2587 = sbr.rel (%p2585) target = $region48
        $region47: #{tpu_custom_call.1} parent=35 // pred_region
          %s2589 = ssub.s32 2048, 2048
          %2590 = vsyncadd %s2581, %s2589
          %s2591 = smul.addr %s22, 16
          %s2592 = smul.addr %s2591, 128
          %s2593 = scalar_lea.hbm %s4, %s2592
          %s2594 = sshll.u32 %s2584, 4
          %s2595 = int_to_ptr.vmem [resolvable:$true] %s2594
          %2600 = dma.vmem_to_hbm [thread:$0]  %s2595, 2048, %s2593, %s2581, 256, 256, 16
        $region48: #{tpu_custom_call.1} parent=35 // pred_fallthru
          _
      $region36: #{tpu_custom_call.1} parent=5 // pred_fallthru
        _
      %p2601 = scmp.le.s32.totalorder 2, %s17
      // Predicated region
      $region49: #{tpu_custom_call.1} parent=5 // pred_check
        %p2602 = pneg %p2601
      $region50: #{tpu_custom_call.1} parent=5 // pred_check_branch
        %2604 = sbr.rel (%p2602) target = $region52
      $region51: #{tpu_custom_call.1} parent=5 // pred_region
        %s2605 = ssub.s32 %s17, 2
        // Predicated region
        $region53: #{tpu_custom_call.1} parent=51 // pred_check
          %p2606 = pneg %p135
        $region54: #{tpu_custom_call.1} parent=51 // pred_check_branch
          %2608 = sbr.rel (%p2606) target = $region56
        $region55: #{tpu_custom_call.1} parent=51 // pred_region
          %s2609 = sand.u32 %s120, 1
          %s2610 = scalar_lea.sflag [#allocation5], %s2609
          %s2611 = sand.u32 %s120, 1
          %s2612 = smul.addr %s2611, 128
          %s2613 = scalar_lea.vmem [#allocation8], %s2612
          %2614 = dma.done %s2610, 2048
        $region56: #{tpu_custom_call.1} parent=51 // pred_fallthru
          _
      $region52: #{tpu_custom_call.1} parent=5 // pred_fallthru
        _
    $region6: #{tpu_custom_call.1} parent=1 // loop_footer
      %s21 = sadd.s32 1, %s17
    $region7: #{tpu_custom_call.1} parent=1 // loop_footer_branch
      %16 = sbr.rel target = $region3
    $region8: #{tpu_custom_call.1} parent=1 // loop_exit
      _
    %2615 = vsyncpa [#allocation4], 1
    %s2616 = scalar_lea.sflag [#allocation4], 1
    %2617 = vsyncpa %s2616, 1
    %2618 = vsyncpa [#allocation7], 1
    %2619 = vsyncpa [#allocation5], 1
    %s2620 = scalar_lea.sflag [#allocation5], 1
    %2621 = vsyncpa %s2620, 1

</llo_original>
